<compile_context>
chip_gen: v5e
topology: v5e:2x2
jax: 0.10.0
libtpu: 0.0.40
codegen_flags: <defaults>
</compile_context>

<pallas_src>
import math

import jax
import jax.numpy as jnp
import numpy as np
from jax.experimental import pallas as pl
from jax.experimental.pallas import tpu as pltpu  # noqa: F401  (TPU backend)

# ----------------------------- sizes ------------------------------------
B, S, D_IN = 2, 8, 16           # batch, slate_length, input_dim
H, HEADS, FFN, OUT = 32, 4, 64, 1
DH = H // HEADS
N = B * S                       # flattened token count
LN_EPS = 1e-5
MAX_POS = 64
NEG_INF = -1e9

# row offsets inside the packed weight slab  [D_IN + FFN + H + 1, H]
_W_IN0, _W_IN1 = 0, D_IN
_WF2_0, _WF2_1 = D_IN, D_IN + FFN
_WFC2_0, _WFC2_1 = D_IN + FFN, D_IN + FFN + H
_WSCORE = D_IN + FFN + H        # single row: wout.T

# row indices inside the packed bias / LayerNorm slab [9, H]
(_B_IN, _B_O, _LN1G, _LN1B, _B_F2, _LN2G, _LN2B, _B_FC2, _B_OUT) = range(9)


# --------------------------- kernel body --------------------------------
def _layernorm(x, gamma, beta):
    mu = jnp.mean(x, axis=-1, keepdims=True)
    xc = x - mu
    var = jnp.mean(xc * xc, axis=-1, keepdims=True)
    return xc * jax.lax.rsqrt(var + LN_EPS) * gamma + beta


def ltr_kernel(x_ref, pos_ref, abias_ref,
               wqkv_ref, bqkv_ref, wo_ref,
               ffn1_ref, wstack_ref, vec_ref,
               enc_ref, out_ref):
    x = x_ref[...]                  # [N, D_IN]
    pos = pos_ref[...]              # [N, H]
    abias = abias_ref[...]          # [N, N] additive attention bias

    # ---- unpack row-stacked params (static sublane slices, cheap) ----
    w_in = wstack_ref[_W_IN0:_W_IN1, :]            # [D_IN, H]
    w_f2 = wstack_ref[_WF2_0:_WF2_1, :]            # [FFN, H]
    w_fc2 = wstack_ref[_WFC2_0:_WFC2_1, :]         # [H, H]
    w_score = wstack_ref[_WSCORE:_WSCORE + 1, :]   # [1, H]   (wout.T)

    w_f1 = ffn1_ref[0:H, :]                        # [H, FFN]
    b_f1 = ffn1_ref[H:H + 1, :]                    # [1, FFN]

    b_in = vec_ref[_B_IN:_B_IN + 1, :]
    b_o = vec_ref[_B_O:_B_O + 1, :]
    ln1g = vec_ref[_LN1G:_LN1G + 1, :]
    ln1b = vec_ref[_LN1B:_LN1B + 1, :]
    b_f2 = vec_ref[_B_F2:_B_F2 + 1, :]
    ln2g = vec_ref[_LN2G:_LN2G + 1, :]
    ln2b = vec_ref[_LN2B:_LN2B + 1, :]
    b_fc2 = vec_ref[_B_FC2:_B_FC2 + 1, :]
    # bout is stored replicated across the row; N <= H so a [1, N] slice
    # broadcasts directly onto the lane-dense score row.
    b_out_row = vec_ref[_B_OUT:_B_OUT + 1, 0:N]    # [1, N]

    wqkv = wqkv_ref[...]            # [3, HEADS, H, DH]
    bqkv = bqkv_ref[...]            # [3, HEADS, 1, DH]
    wo_all = wo_ref[...]            # [HEADS, DH, H]

    # ---- input_layer (FCModel): Linear + ReLU, then positional encoding ----
    h = jnp.maximum(
        jnp.dot(x, w_in, preferred_element_type=jnp.float32) + b_in, 0.0) + pos

    # ---- multi-head self-attention (weights pre-split per head) ----
    scale = 1.0 / math.sqrt(DH)
    score_heads = []
    v_heads = []
    for hd in range(HEADS):
        q_h = jnp.dot(h, wqkv[0, hd], preferred_element_type=jnp.float32) + bqkv[0, hd]
        k_h = jnp.dot(h, wqkv[1, hd], preferred_element_type=jnp.float32) + bqkv[1, hd]
        v_h = jnp.dot(h, wqkv[2, hd], preferred_element_type=jnp.float32) + bqkv[2, hd]
        score_heads.append(
            jnp.dot(q_h, k_h.T, preferred_element_type=jnp.float32) * scale)
        v_heads.append(v_h)

    # fused softmax over all heads at once: [HEADS, N, N]
    scores = jnp.stack(score_heads, axis=0) + abias[None, :, :]
    m = jnp.max(scores, axis=-1, keepdims=True)
    p = jnp.exp(scores - m)
    denom = jnp.sum(p, axis=-1, keepdims=True)
    r = pl.reciprocal(denom, approx=True)
    r = r * (2.0 - denom * r)            # one Newton step -> ~f32 accuracy
    p = p * r

    # per-head context + output projection, accumulated (no lane concat)
    attn = b_o                           # [1, H], broadcasts on the first add
    for hd in range(HEADS):
        ctx_h = jnp.dot(p[hd], v_heads[hd], preferred_element_type=jnp.float32)   # [N, DH]
        attn = attn + jnp.dot(ctx_h, wo_all[hd], preferred_element_type=jnp.float32)

    # ---- residual + LayerNorm, position-wise FFN, residual + LayerNorm ----
    h1 = _layernorm(h + attn, ln1g, ln1b)
    f = jnp.maximum(
        jnp.dot(h1, w_f1, preferred_element_type=jnp.float32) + b_f1, 0.0)
    f = jnp.dot(f, w_f2, preferred_element_type=jnp.float32) + b_f2
    h2 = _layernorm(h1 + f, ln2g, ln2b)

    enc_ref[...] = h2                    # after_transformer_x, [N, H]

    # ---- fc2 + output_layer, emitted lane-dense as [1, N] ----
    g = jnp.dot(h2, w_fc2, preferred_element_type=jnp.float32) + b_fc2   # [N, H]
    out_ref[...] = (jnp.dot(w_score, g.T, preferred_element_type=jnp.float32)
                    + b_out_row)                                         # [1, N]


# ------------------------- param packing (host) ---------------------------
def pack_params(params):
    (w_in, b_in, wq, bq, wk, bk, wv, bv, wo, bo,
     ln1g, ln1b, wf1, bf1, wf2, bf2, ln2g, ln2b,
     wfc2, bfc2, wout, bout) = params

    def heads_w(w):      # [H, H] -> [HEADS, H, DH]  (per-head output columns)
        return jnp.transpose(w.reshape(H, HEADS, DH), (1, 0, 2))

    def heads_b(b):      # [1, H] -> [HEADS, 1, DH]
        return b.reshape(HEADS, DH)[:, None, :]

    w_qkv = jnp.stack([heads_w(wq), heads_w(wk), heads_w(wv)], axis=0)   # [3,HEADS,H,DH]
    b_qkv = jnp.stack([heads_b(bq), heads_b(bk), heads_b(bv)], axis=0)   # [3,HEADS,1,DH]
    wo_h = wo.reshape(HEADS, DH, H)                                      # per-head rows of wo
    ffn1_pack = jnp.concatenate([wf1, bf1], axis=0)                      # [H+1, FFN]
    w_stack = jnp.concatenate([w_in, wf2, wfc2, wout.T], axis=0)         # [D_IN+FFN+H+1, H]
    b_out_row = jnp.broadcast_to(bout.reshape(1, 1), (1, H))
    vec_pack = jnp.concatenate(
        [b_in, bo, ln1g, ln1b, bf2, ln2g, ln2b, bfc2, b_out_row], axis=0)  # [9, H]
    return w_qkv, b_qkv, wo_h, ffn1_pack, w_stack, vec_pack


# ------------------------------ wrapper -----------------------------------
@jax.jit
def ltr_forward(x, mask, indices, pos_table, packed):
    w_qkv, b_qkv, wo_h, ffn1_pack, w_stack, vec_pack = packed

    x_flat = x.reshape(N, D_IN)
    pos_flat = pos_table[indices].reshape(N, H)     # positional-encoding gather (glue)

    # additive attention bias: block-diagonal over batches + key padding mask
    pad = mask.reshape(N)
    bid = jnp.repeat(jnp.arange(B, dtype=jnp.int32), S)
    allowed = (bid[:, None] == bid[None, :]) & (pad[None, :] < 0.5)
    attn_bias = jnp.where(allowed, 0.0, NEG_INF).astype(jnp.float32)

    enc_flat, out_row = pl.pallas_call(
        ltr_kernel,
        out_shape=(jax.ShapeDtypeStruct((N, H), jnp.float32),
                   jax.ShapeDtypeStruct((1, N), jnp.float32)),
    )(x_flat, pos_flat, attn_bias, w_qkv, b_qkv, wo_h,
      ffn1_pack, w_stack, vec_pack)

    return enc_flat.reshape(B, S, H), out_row.reshape(B, S, OUT)


# ----------------------- params / reference -------------------------------
def make_params(key):
    ks = jax.random.split(key, 22)
    sc = 0.05

    def w(k, shape):
        return sc * jax.random.normal(k, shape, jnp.float32)

    def b(k, shape):
        return 0.1 * jax.random.normal(k, shape, jnp.float32)

    w_in = w(ks[0], (D_IN, H)); b_in = b(ks[1], (1, H))
    wq = w(ks[2], (H, H)); bq = b(ks[3], (1, H))
    wk = w(ks[4], (H, H)); bk = b(ks[5], (1, H))
    wv = w(ks[6], (H, H)); bv = b(ks[7], (1, H))
    wo = w(ks[8], (H, H)); bo = b(ks[9], (1, H))
    ln1g = 1.0 + 0.1 * jax.random.normal(ks[10], (1, H), jnp.float32)
    ln1b = b(ks[11], (1, H))
    wf1 = w(ks[12], (H, FFN)); bf1 = b(ks[13], (1, FFN))
    wf2 = w(ks[14], (FFN, H)); bf2 = b(ks[15], (1, H))
    ln2g = 1.0 + 0.1 * jax.random.normal(ks[16], (1, H), jnp.float32)
    ln2b = b(ks[17], (1, H))
    wfc2 = w(ks[18], (H, H)); bfc2 = b(ks[19], (1, H))
    wout = w(ks[20], (H, OUT)); bout = b(ks[21], (1, OUT))
    return (w_in, b_in, wq, bq, wk, bk, wv, bv, wo, bo,
            ln1g, ln1b, wf1, bf1, wf2, bf2, ln2g, ln2b,
            wfc2, bfc2, wout, bout)


def sinusoidal_table(max_pos, dim):
    pos = np.arange(max_pos)[:, None].astype(np.float32)
    i = np.arange(dim)[None, :].astype(np.float32)
    angle = pos / np.power(10000.0, (2.0 * (i // 2)) / dim)
    tbl = np.where(np.arange(dim) % 2 == 0, np.sin(angle), np.cos(angle))
    return jnp.asarray(tbl, jnp.float32)


def ltr_reference(x, mask, pos, params):
    (w_in, b_in, wq, bq, wk, bk, wv, bv, wo, bo,
     ln1g, ln1b, wf1, bf1, wf2, bf2, ln2g, ln2b,
     wfc2, bfc2, wout, bout) = params

    def ln(t, g, bta):
        mu = jnp.mean(t, -1, keepdims=True)
        var = jnp.mean((t - mu) ** 2, -1, keepdims=True)
        return (t - mu) * jax.lax.rsqrt(var + LN_EPS) * g + bta

    h = jnp.maximum(x @ w_in + b_in, 0.0) + pos
    q = (h @ wq + bq).reshape(B, S, HEADS, DH)
    k = (h @ wk + bk).reshape(B, S, HEADS, DH)
    v = (h @ wv + bv).reshape(B, S, HEADS, DH)
    scores = jnp.einsum('bqhd,bkhd->bhqk', q, k) / math.sqrt(DH)
    scores = scores + NEG_INF * mask[:, None, None, :]          # mask over keys
    p = jax.nn.softmax(scores, axis=-1)
    attn = jnp.einsum('bhqk,bkhd->bqhd', p, v).reshape(B, S, H) @ wo + bo
    h1 = ln(h + attn, ln1g, ln1b)
    f = jnp.maximum(h1 @ wf1 + bf1, 0.0) @ wf2 + bf2
    h2 = ln(h1 + f, ln2g, ln2b)
    out = (h2 @ wfc2 + bfc2) @ wout + bout
    return h2, out


# ------------------------------- main -------------------------------------
if __name__ == "__main__":
    key = jax.random.PRNGKey(0)
    kx, _ = jax.random.split(key)

    x = jax.random.normal(kx, (B, S, D_IN), jnp.float32)
    # padding mask: 1.0 = padded item (last 2 items of batch 1 padded)
    mask_np = np.zeros((B, S), np.float32)
    mask_np[1, -2:] = 1.0
    mask = jnp.asarray(mask_np)
    # original item ranks used in positional encoding
    indices = jnp.tile(jnp.arange(S, dtype=jnp.int32)[None, :], (B, 1))

    pos_table = sinusoidal_table(MAX_POS, H)
    params = make_params(jax.random.PRNGKey(42))
    packed = pack_params(params)

    enc_out, out = ltr_forward(x, mask, indices, pos_table, packed)
    jax.block_until_ready((enc_out, out))

    pos = pos_table[indices]
    ref_enc, ref_out = ltr_reference(x, mask, pos, params)
    np.testing.assert_allclose(np.asarray(enc_out), np.asarray(ref_enc),
                               rtol=1e-4, atol=1e-4)
    np.testing.assert_allclose(np.asarray(out), np.asarray(ref_out),
                               rtol=1e-4, atol=1e-4)

    assert enc_out.shape == (B, S, H) and out.shape == (B, S, OUT)
    print("KERNEL_OK")
</pallas_src>

<mosaic_0001>
module attributes {stable_mosaic.version = 11 : i64} {
  func.func @ltr_kernel(%arg0: memref<16x16xf32, #tpu.memory_space<vmem>>, %arg1: memref<16x32xf32, #tpu.memory_space<vmem>>, %arg2: memref<16x16xf32, #tpu.memory_space<vmem>>, %arg3: memref<3x4x32x8xf32, #tpu.memory_space<vmem>>, %arg4: memref<3x4x1x8xf32, #tpu.memory_space<vmem>>, %arg5: memref<4x8x32xf32, #tpu.memory_space<vmem>>, %arg6: memref<33x64xf32, #tpu.memory_space<vmem>>, %arg7: memref<113x32xf32, #tpu.memory_space<vmem>>, %arg8: memref<9x32xf32, #tpu.memory_space<vmem>>, %arg9: memref<16x32xf32, #tpu.memory_space<vmem>>, %arg10: memref<1x16xf32, #tpu.memory_space<vmem>>) attributes {dimension_semantics = [], scalar_prefetch = 0 : i64, scratch_operands = 0 : i64, tpu.core_type = #tpu.core_type<tc>} {
    %c0 = arith.constant 0 : index
    %c0_0 = arith.constant 0 : index
    %0 = vector.load %arg0[%c0, %c0_0] : memref<16x16xf32, #tpu.memory_space<vmem>>, vector<16x16xf32>
    %c0_1 = arith.constant 0 : index
    %c0_2 = arith.constant 0 : index
    %1 = vector.load %arg1[%c0_1, %c0_2] : memref<16x32xf32, #tpu.memory_space<vmem>>, vector<16x32xf32>
    %c0_3 = arith.constant 0 : index
    %c0_4 = arith.constant 0 : index
    %2 = vector.load %arg2[%c0_3, %c0_4] : memref<16x16xf32, #tpu.memory_space<vmem>>, vector<16x16xf32>
    %c0_5 = arith.constant 0 : index
    %c0_6 = arith.constant 0 : index
    %3 = vector.load %arg7[%c0_5, %c0_6] : memref<113x32xf32, #tpu.memory_space<vmem>>, vector<16x32xf32>
    %c16 = arith.constant 16 : index
    %c0_7 = arith.constant 0 : index
    %4 = vector.load %arg7[%c16, %c0_7] : memref<113x32xf32, #tpu.memory_space<vmem>>, vector<64x32xf32>
    %c80 = arith.constant 80 : index
    %c0_8 = arith.constant 0 : index
    %5 = vector.load %arg7[%c80, %c0_8] : memref<113x32xf32, #tpu.memory_space<vmem>>, vector<32x32xf32>
    %c112 = arith.constant 112 : index
    %c0_9 = arith.constant 0 : index
    %6 = vector.load %arg7[%c112, %c0_9] : memref<113x32xf32, #tpu.memory_space<vmem>>, vector<1x32xf32>
    %c0_10 = arith.constant 0 : index
    %c0_11 = arith.constant 0 : index
    %7 = vector.load %arg6[%c0_10, %c0_11] : memref<33x64xf32, #tpu.memory_space<vmem>>, vector<32x64xf32>
    %c32 = arith.constant 32 : index
    %c0_12 = arith.constant 0 : index
    %8 = vector.load %arg6[%c32, %c0_12] : memref<33x64xf32, #tpu.memory_space<vmem>>, vector<1x64xf32>
    %c0_13 = arith.constant 0 : index
    %c0_14 = arith.constant 0 : index
    %9 = vector.load %arg8[%c0_13, %c0_14] : memref<9x32xf32, #tpu.memory_space<vmem>>, vector<1x32xf32>
    %c1 = arith.constant 1 : index
    %c0_15 = arith.constant 0 : index
    %10 = vector.load %arg8[%c1, %c0_15] : memref<9x32xf32, #tpu.memory_space<vmem>>, vector<1x32xf32>
    %c2 = arith.constant 2 : index
    %c0_16 = arith.constant 0 : index
    %11 = vector.load %arg8[%c2, %c0_16] : memref<9x32xf32, #tpu.memory_space<vmem>>, vector<1x32xf32>
    %c3 = arith.constant 3 : index
    %c0_17 = arith.constant 0 : index
    %12 = vector.load %arg8[%c3, %c0_17] : memref<9x32xf32, #tpu.memory_space<vmem>>, vector<1x32xf32>
    %c4 = arith.constant 4 : index
    %c0_18 = arith.constant 0 : index
    %13 = vector.load %arg8[%c4, %c0_18] : memref<9x32xf32, #tpu.memory_space<vmem>>, vector<1x32xf32>
    %c5 = arith.constant 5 : index
    %c0_19 = arith.constant 0 : index
    %14 = vector.load %arg8[%c5, %c0_19] : memref<9x32xf32, #tpu.memory_space<vmem>>, vector<1x32xf32>
    %c6 = arith.constant 6 : index
    %c0_20 = arith.constant 0 : index
    %15 = vector.load %arg8[%c6, %c0_20] : memref<9x32xf32, #tpu.memory_space<vmem>>, vector<1x32xf32>
    %c7 = arith.constant 7 : index
    %c0_21 = arith.constant 0 : index
    %16 = vector.load %arg8[%c7, %c0_21] : memref<9x32xf32, #tpu.memory_space<vmem>>, vector<1x32xf32>
    %c8 = arith.constant 8 : index
    %c0_22 = arith.constant 0 : index
    %17 = vector.load %arg8[%c8, %c0_22] : memref<9x32xf32, #tpu.memory_space<vmem>>, vector<1x16xf32>
    %c0_23 = arith.constant 0 : index
    %c0_24 = arith.constant 0 : index
    %c0_25 = arith.constant 0 : index
    %c0_26 = arith.constant 0 : index
    %18 = vector.load %arg3[%c0_23, %c0_24, %c0_25, %c0_26] : memref<3x4x32x8xf32, #tpu.memory_space<vmem>>, vector<3x4x32x8xf32>
    %c0_27 = arith.constant 0 : index
    %c0_28 = arith.constant 0 : index
    %c0_29 = arith.constant 0 : index
    %c0_30 = arith.constant 0 : index
    %19 = vector.load %arg4[%c0_27, %c0_28, %c0_29, %c0_30] : memref<3x4x1x8xf32, #tpu.memory_space<vmem>>, vector<3x4x1x8xf32>
    %c0_31 = arith.constant 0 : index
    %c0_32 = arith.constant 0 : index
    %c0_33 = arith.constant 0 : index
    %20 = vector.load %arg5[%c0_31, %c0_32, %c0_33] : memref<4x8x32xf32, #tpu.memory_space<vmem>>, vector<4x8x32xf32>
    %cst = arith.constant dense<0.000000e+00> : vector<16x32xf32>
    %21 = tpu.matmul %0, %3, %cst {dimension_numbers = #tpu.dot_dimension_numbers<[1], [0], [0], [1], [0, 0, 1, 1], [], []>} : vector<16x16xf32>, vector<16x32xf32>, vector<16x32xf32> -> vector<16x32xf32>
    %22 = vector.broadcast %9 : vector<1x32xf32> to vector<16x32xf32>
    %23 = arith.addf %21, %22 : vector<16x32xf32>
    %cst_34 = arith.constant 0.000000e+00 : f32
    %24 = vector.broadcast %cst_34 : f32 to vector<16x32xf32>
    %25 = arith.maximumf %23, %24 : vector<16x32xf32>
    %26 = arith.addf %25, %1 : vector<16x32xf32>
    %27 = vector.extract_strided_slice %18 {offsets = [0, 0, 0, 0], sizes = [1, 1, 32, 8], strides = [1, 1, 1, 1]} : vector<3x4x32x8xf32> to vector<1x1x32x8xf32>
    %28 = vector.shape_cast %27 : vector<1x1x32x8xf32> to vector<32x8xf32>
    %cst_35 = arith.constant dense<0.000000e+00> : vector<16x8xf32>
    %29 = tpu.matmul %26, %28, %cst_35 {dimension_numbers = #tpu.dot_dimension_numbers<[1], [0], [0], [1], [0, 0, 1, 1], [], []>} : vector<16x32xf32>, vector<32x8xf32>, vector<16x8xf32> -> vector<16x8xf32>
    %30 = vector.extract_strided_slice %19 {offsets = [0, 0, 0, 0], sizes = [1, 1, 1, 8], strides = [1, 1, 1, 1]} : vector<3x4x1x8xf32> to vector<1x1x1x8xf32>
    %31 = vector.shape_cast %30 : vector<1x1x1x8xf32> to vector<1x8xf32>
    %32 = vector.broadcast %31 : vector<1x8xf32> to vector<16x8xf32>
    %33 = arith.addf %29, %32 : vector<16x8xf32>
    %34 = vector.extract_strided_slice %18 {offsets = [1, 0, 0, 0], sizes = [1, 1, 32, 8], strides = [1, 1, 1, 1]} : vector<3x4x32x8xf32> to vector<1x1x32x8xf32>
    %35 = vector.shape_cast %34 : vector<1x1x32x8xf32> to vector<32x8xf32>
    %cst_36 = arith.constant dense<0.000000e+00> : vector<16x8xf32>
    %36 = tpu.matmul %26, %35, %cst_36 {dimension_numbers = #tpu.dot_dimension_numbers<[1], [0], [0], [1], [0, 0, 1, 1], [], []>} : vector<16x32xf32>, vector<32x8xf32>, vector<16x8xf32> -> vector<16x8xf32>
    %37 = vector.extract_strided_slice %19 {offsets = [1, 0, 0, 0], sizes = [1, 1, 1, 8], strides = [1, 1, 1, 1]} : vector<3x4x1x8xf32> to vector<1x1x1x8xf32>
    %38 = vector.shape_cast %37 : vector<1x1x1x8xf32> to vector<1x8xf32>
    %39 = vector.broadcast %38 : vector<1x8xf32> to vector<16x8xf32>
    %40 = arith.addf %36, %39 : vector<16x8xf32>
    %41 = vector.extract_strided_slice %18 {offsets = [2, 0, 0, 0], sizes = [1, 1, 32, 8], strides = [1, 1, 1, 1]} : vector<3x4x32x8xf32> to vector<1x1x32x8xf32>
    %42 = vector.shape_cast %41 : vector<1x1x32x8xf32> to vector<32x8xf32>
    %cst_37 = arith.constant dense<0.000000e+00> : vector<16x8xf32>
    %43 = tpu.matmul %26, %42, %cst_37 {dimension_numbers = #tpu.dot_dimension_numbers<[1], [0], [0], [1], [0, 0, 1, 1], [], []>} : vector<16x32xf32>, vector<32x8xf32>, vector<16x8xf32> -> vector<16x8xf32>
    %44 = vector.extract_strided_slice %19 {offsets = [2, 0, 0, 0], sizes = [1, 1, 1, 8], strides = [1, 1, 1, 1]} : vector<3x4x1x8xf32> to vector<1x1x1x8xf32>
    %45 = vector.shape_cast %44 : vector<1x1x1x8xf32> to vector<1x8xf32>
    %46 = vector.broadcast %45 : vector<1x8xf32> to vector<16x8xf32>
    %47 = arith.addf %43, %46 : vector<16x8xf32>
    %48 = tpu.transpose %40, [1, 0] : vector<16x8xf32> -> vector<8x16xf32>
    %cst_38 = arith.constant dense<0.000000e+00> : vector<16x16xf32>
    %49 = tpu.matmul %33, %48, %cst_38 {dimension_numbers = #tpu.dot_dimension_numbers<[1], [0], [0], [1], [0, 0, 1, 1], [], []>} : vector<16x8xf32>, vector<8x16xf32>, vector<16x16xf32> -> vector<16x16xf32>
    %cst_39 = arith.constant 0.353553385 : f32
    %50 = vector.broadcast %cst_39 : f32 to vector<16x16xf32>
    %51 = arith.mulf %49, %50 : vector<16x16xf32>
    %52 = vector.extract_strided_slice %18 {offsets = [0, 1, 0, 0], sizes = [1, 1, 32, 8], strides = [1, 1, 1, 1]} : vector<3x4x32x8xf32> to vector<1x1x32x8xf32>
    %53 = vector.shape_cast %52 : vector<1x1x32x8xf32> to vector<32x8xf32>
    %cst_40 = arith.constant dense<0.000000e+00> : vector<16x8xf32>
    %54 = tpu.matmul %26, %53, %cst_40 {dimension_numbers = #tpu.dot_dimension_numbers<[1], [0], [0], [1], [0, 0, 1, 1], [], []>} : vector<16x32xf32>, vector<32x8xf32>, vector<16x8xf32> -> vector<16x8xf32>
    %55 = vector.extract_strided_slice %19 {offsets = [0, 1, 0, 0], sizes = [1, 1, 1, 8], strides = [1, 1, 1, 1]} : vector<3x4x1x8xf32> to vector<1x1x1x8xf32>
    %56 = vector.shape_cast %55 : vector<1x1x1x8xf32> to vector<1x8xf32>
    %57 = vector.broadcast %56 : vector<1x8xf32> to vector<16x8xf32>
    %58 = arith.addf %54, %57 : vector<16x8xf32>
    %59 = vector.extract_strided_slice %18 {offsets = [1, 1, 0, 0], sizes = [1, 1, 32, 8], strides = [1, 1, 1, 1]} : vector<3x4x32x8xf32> to vector<1x1x32x8xf32>
    %60 = vector.shape_cast %59 : vector<1x1x32x8xf32> to vector<32x8xf32>
    %cst_41 = arith.constant dense<0.000000e+00> : vector<16x8xf32>
    %61 = tpu.matmul %26, %60, %cst_41 {dimension_numbers = #tpu.dot_dimension_numbers<[1], [0], [0], [1], [0, 0, 1, 1], [], []>} : vector<16x32xf32>, vector<32x8xf32>, vector<16x8xf32> -> vector<16x8xf32>
    %62 = vector.extract_strided_slice %19 {offsets = [1, 1, 0, 0], sizes = [1, 1, 1, 8], strides = [1, 1, 1, 1]} : vector<3x4x1x8xf32> to vector<1x1x1x8xf32>
    %63 = vector.shape_cast %62 : vector<1x1x1x8xf32> to vector<1x8xf32>
    %64 = vector.broadcast %63 : vector<1x8xf32> to vector<16x8xf32>
    %65 = arith.addf %61, %64 : vector<16x8xf32>
    %66 = vector.extract_strided_slice %18 {offsets = [2, 1, 0, 0], sizes = [1, 1, 32, 8], strides = [1, 1, 1, 1]} : vector<3x4x32x8xf32> to vector<1x1x32x8xf32>
    %67 = vector.shape_cast %66 : vector<1x1x32x8xf32> to vector<32x8xf32>
    %cst_42 = arith.constant dense<0.000000e+00> : vector<16x8xf32>
    %68 = tpu.matmul %26, %67, %cst_42 {dimension_numbers = #tpu.dot_dimension_numbers<[1], [0], [0], [1], [0, 0, 1, 1], [], []>} : vector<16x32xf32>, vector<32x8xf32>, vector<16x8xf32> -> vector<16x8xf32>
    %69 = vector.extract_strided_slice %19 {offsets = [2, 1, 0, 0], sizes = [1, 1, 1, 8], strides = [1, 1, 1, 1]} : vector<3x4x1x8xf32> to vector<1x1x1x8xf32>
    %70 = vector.shape_cast %69 : vector<1x1x1x8xf32> to vector<1x8xf32>
    %71 = vector.broadcast %70 : vector<1x8xf32> to vector<16x8xf32>
    %72 = arith.addf %68, %71 : vector<16x8xf32>
    %73 = tpu.transpose %65, [1, 0] : vector<16x8xf32> -> vector<8x16xf32>
    %cst_43 = arith.constant dense<0.000000e+00> : vector<16x16xf32>
    %74 = tpu.matmul %58, %73, %cst_43 {dimension_numbers = #tpu.dot_dimension_numbers<[1], [0], [0], [1], [0, 0, 1, 1], [], []>} : vector<16x8xf32>, vector<8x16xf32>, vector<16x16xf32> -> vector<16x16xf32>
    %cst_44 = arith.constant 0.353553385 : f32
    %75 = vector.broadcast %cst_44 : f32 to vector<16x16xf32>
    %76 = arith.mulf %74, %75 : vector<16x16xf32>
    %77 = vector.extract_strided_slice %18 {offsets = [0, 2, 0, 0], sizes = [1, 1, 32, 8], strides = [1, 1, 1, 1]} : vector<3x4x32x8xf32> to vector<1x1x32x8xf32>
    %78 = vector.shape_cast %77 : vector<1x1x32x8xf32> to vector<32x8xf32>
    %cst_45 = arith.constant dense<0.000000e+00> : vector<16x8xf32>
    %79 = tpu.matmul %26, %78, %cst_45 {dimension_numbers = #tpu.dot_dimension_numbers<[1], [0], [0], [1], [0, 0, 1, 1], [], []>} : vector<16x32xf32>, vector<32x8xf32>, vector<16x8xf32> -> vector<16x8xf32>
    %80 = vector.extract_strided_slice %19 {offsets = [0, 2, 0, 0], sizes = [1, 1, 1, 8], strides = [1, 1, 1, 1]} : vector<3x4x1x8xf32> to vector<1x1x1x8xf32>
    %81 = vector.shape_cast %80 : vector<1x1x1x8xf32> to vector<1x8xf32>
    %82 = vector.broadcast %81 : vector<1x8xf32> to vector<16x8xf32>
    %83 = arith.addf %79, %82 : vector<16x8xf32>
    %84 = vector.extract_strided_slice %18 {offsets = [1, 2, 0, 0], sizes = [1, 1, 32, 8], strides = [1, 1, 1, 1]} : vector<3x4x32x8xf32> to vector<1x1x32x8xf32>
    %85 = vector.shape_cast %84 : vector<1x1x32x8xf32> to vector<32x8xf32>
    %cst_46 = arith.constant dense<0.000000e+00> : vector<16x8xf32>
    %86 = tpu.matmul %26, %85, %cst_46 {dimension_numbers = #tpu.dot_dimension_numbers<[1], [0], [0], [1], [0, 0, 1, 1], [], []>} : vector<16x32xf32>, vector<32x8xf32>, vector<16x8xf32> -> vector<16x8xf32>
    %87 = vector.extract_strided_slice %19 {offsets = [1, 2, 0, 0], sizes = [1, 1, 1, 8], strides = [1, 1, 1, 1]} : vector<3x4x1x8xf32> to vector<1x1x1x8xf32>
    %88 = vector.shape_cast %87 : vector<1x1x1x8xf32> to vector<1x8xf32>
    %89 = vector.broadcast %88 : vector<1x8xf32> to vector<16x8xf32>
    %90 = arith.addf %86, %89 : vector<16x8xf32>
    %91 = vector.extract_strided_slice %18 {offsets = [2, 2, 0, 0], sizes = [1, 1, 32, 8], strides = [1, 1, 1, 1]} : vector<3x4x32x8xf32> to vector<1x1x32x8xf32>
    %92 = vector.shape_cast %91 : vector<1x1x32x8xf32> to vector<32x8xf32>
    %cst_47 = arith.constant dense<0.000000e+00> : vector<16x8xf32>
    %93 = tpu.matmul %26, %92, %cst_47 {dimension_numbers = #tpu.dot_dimension_numbers<[1], [0], [0], [1], [0, 0, 1, 1], [], []>} : vector<16x32xf32>, vector<32x8xf32>, vector<16x8xf32> -> vector<16x8xf32>
    %94 = vector.extract_strided_slice %19 {offsets = [2, 2, 0, 0], sizes = [1, 1, 1, 8], strides = [1, 1, 1, 1]} : vector<3x4x1x8xf32> to vector<1x1x1x8xf32>
    %95 = vector.shape_cast %94 : vector<1x1x1x8xf32> to vector<1x8xf32>
    %96 = vector.broadcast %95 : vector<1x8xf32> to vector<16x8xf32>
    %97 = arith.addf %93, %96 : vector<16x8xf32>
    %98 = tpu.transpose %90, [1, 0] : vector<16x8xf32> -> vector<8x16xf32>
    %cst_48 = arith.constant dense<0.000000e+00> : vector<16x16xf32>
    %99 = tpu.matmul %83, %98, %cst_48 {dimension_numbers = #tpu.dot_dimension_numbers<[1], [0], [0], [1], [0, 0, 1, 1], [], []>} : vector<16x8xf32>, vector<8x16xf32>, vector<16x16xf32> -> vector<16x16xf32>
    %cst_49 = arith.constant 0.353553385 : f32
    %100 = vector.broadcast %cst_49 : f32 to vector<16x16xf32>
    %101 = arith.mulf %99, %100 : vector<16x16xf32>
    %102 = vector.extract_strided_slice %18 {offsets = [0, 3, 0, 0], sizes = [1, 1, 32, 8], strides = [1, 1, 1, 1]} : vector<3x4x32x8xf32> to vector<1x1x32x8xf32>
    %103 = vector.shape_cast %102 : vector<1x1x32x8xf32> to vector<32x8xf32>
    %cst_50 = arith.constant dense<0.000000e+00> : vector<16x8xf32>
    %104 = tpu.matmul %26, %103, %cst_50 {dimension_numbers = #tpu.dot_dimension_numbers<[1], [0], [0], [1], [0, 0, 1, 1], [], []>} : vector<16x32xf32>, vector<32x8xf32>, vector<16x8xf32> -> vector<16x8xf32>
    %105 = vector.extract_strided_slice %19 {offsets = [0, 3, 0, 0], sizes = [1, 1, 1, 8], strides = [1, 1, 1, 1]} : vector<3x4x1x8xf32> to vector<1x1x1x8xf32>
    %106 = vector.shape_cast %105 : vector<1x1x1x8xf32> to vector<1x8xf32>
    %107 = vector.broadcast %106 : vector<1x8xf32> to vector<16x8xf32>
    %108 = arith.addf %104, %107 : vector<16x8xf32>
    %109 = vector.extract_strided_slice %18 {offsets = [1, 3, 0, 0], sizes = [1, 1, 32, 8], strides = [1, 1, 1, 1]} : vector<3x4x32x8xf32> to vector<1x1x32x8xf32>
    %110 = vector.shape_cast %109 : vector<1x1x32x8xf32> to vector<32x8xf32>
    %cst_51 = arith.constant dense<0.000000e+00> : vector<16x8xf32>
    %111 = tpu.matmul %26, %110, %cst_51 {dimension_numbers = #tpu.dot_dimension_numbers<[1], [0], [0], [1], [0, 0, 1, 1], [], []>} : vector<16x32xf32>, vector<32x8xf32>, vector<16x8xf32> -> vector<16x8xf32>
    %112 = vector.extract_strided_slice %19 {offsets = [1, 3, 0, 0], sizes = [1, 1, 1, 8], strides = [1, 1, 1, 1]} : vector<3x4x1x8xf32> to vector<1x1x1x8xf32>
    %113 = vector.shape_cast %112 : vector<1x1x1x8xf32> to vector<1x8xf32>
    %114 = vector.broadcast %113 : vector<1x8xf32> to vector<16x8xf32>
    %115 = arith.addf %111, %114 : vector<16x8xf32>
    %116 = vector.extract_strided_slice %18 {offsets = [2, 3, 0, 0], sizes = [1, 1, 32, 8], strides = [1, 1, 1, 1]} : vector<3x4x32x8xf32> to vector<1x1x32x8xf32>
    %117 = vector.shape_cast %116 : vector<1x1x32x8xf32> to vector<32x8xf32>
    %cst_52 = arith.constant dense<0.000000e+00> : vector<16x8xf32>
    %118 = tpu.matmul %26, %117, %cst_52 {dimension_numbers = #tpu.dot_dimension_numbers<[1], [0], [0], [1], [0, 0, 1, 1], [], []>} : vector<16x32xf32>, vector<32x8xf32>, vector<16x8xf32> -> vector<16x8xf32>
    %119 = vector.extract_strided_slice %19 {offsets = [2, 3, 0, 0], sizes = [1, 1, 1, 8], strides = [1, 1, 1, 1]} : vector<3x4x1x8xf32> to vector<1x1x1x8xf32>
    %120 = vector.shape_cast %119 : vector<1x1x1x8xf32> to vector<1x8xf32>
    %121 = vector.broadcast %120 : vector<1x8xf32> to vector<16x8xf32>
    %122 = arith.addf %118, %121 : vector<16x8xf32>
    %123 = tpu.transpose %115, [1, 0] : vector<16x8xf32> -> vector<8x16xf32>
    %cst_53 = arith.constant dense<0.000000e+00> : vector<16x16xf32>
    %124 = tpu.matmul %108, %123, %cst_53 {dimension_numbers = #tpu.dot_dimension_numbers<[1], [0], [0], [1], [0, 0, 1, 1], [], []>} : vector<16x8xf32>, vector<8x16xf32>, vector<16x16xf32> -> vector<16x16xf32>
    %cst_54 = arith.constant 0.353553385 : f32
    %125 = vector.broadcast %cst_54 : f32 to vector<16x16xf32>
    %126 = arith.mulf %124, %125 : vector<16x16xf32>
    %127 = vector.shape_cast %51 : vector<16x16xf32> to vector<1x16x16xf32>
    %128 = vector.shape_cast %76 : vector<16x16xf32> to vector<1x16x16xf32>
    %129 = vector.shape_cast %101 : vector<16x16xf32> to vector<1x16x16xf32>
    %130 = vector.shape_cast %126 : vector<16x16xf32> to vector<1x16x16xf32>
    %131 = tpu.concatenate %127, %128, %129, %130 in 0 : vector<1x16x16xf32>, vector<1x16x16xf32>, vector<1x16x16xf32>, vector<1x16x16xf32> -> vector<4x16x16xf32>
    %132 = vector.shape_cast %2 : vector<16x16xf32> to vector<1x16x16xf32>
    %133 = vector.broadcast %132 : vector<1x16x16xf32> to vector<4x16x16xf32>
    %134 = arith.addf %131, %133 : vector<4x16x16xf32>
    %cst_55 = arith.constant dense<0xFF800000> : vector<4x16xf32>
    %135 = vector.multi_reduction <maximumf>, %134, %cst_55 [2] : vector<4x16x16xf32> to vector<4x16xf32>
    %136 = vector.shape_cast %135 : vector<4x16xf32> to vector<4x16x1xf32>
    %137 = vector.broadcast %136 : vector<4x16x1xf32> to vector<4x16x16xf32>
    %138 = arith.subf %134, %137 : vector<4x16x16xf32>
    %139 = math.exp %138 : vector<4x16x16xf32>
    %cst_56 = arith.constant dense<0.000000e+00> : vector<4x16xf32>
    %140 = vector.multi_reduction <add>, %139, %cst_56 [2] : vector<4x16x16xf32> to vector<4x16xf32>
    %141 = vector.shape_cast %140 : vector<4x16xf32> to vector<4x16x1xf32>
    %142 = tpu.reciprocal %141 {approx = true} : vector<4x16x1xf32> -> vector<4x16x1xf32>
    %143 = arith.mulf %141, %142 : vector<4x16x1xf32>
    %cst_57 = arith.constant 2.000000e+00 : f32
    %144 = vector.broadcast %cst_57 : f32 to vector<4x16x1xf32>
    %145 = arith.subf %144, %143 : vector<4x16x1xf32>
    %146 = arith.mulf %142, %145 : vector<4x16x1xf32>
    %147 = vector.broadcast %146 : vector<4x16x1xf32> to vector<4x16x16xf32>
    %148 = arith.mulf %139, %147 : vector<4x16x16xf32>
    %149 = vector.extract_strided_slice %148 {offsets = [0, 0, 0], sizes = [1, 16, 16], strides = [1, 1, 1]} : vector<4x16x16xf32> to vector<1x16x16xf32>
    %150 = vector.shape_cast %149 : vector<1x16x16xf32> to vector<16x16xf32>
    %cst_58 = arith.constant dense<0.000000e+00> : vector<16x8xf32>
    %151 = tpu.matmul %150, %47, %cst_58 {dimension_numbers = #tpu.dot_dimension_numbers<[1], [0], [0], [1], [0, 0, 1, 1], [], []>} : vector<16x16xf32>, vector<16x8xf32>, vector<16x8xf32> -> vector<16x8xf32>
    %152 = vector.extract_strided_slice %20 {offsets = [0, 0, 0], sizes = [1, 8, 32], strides = [1, 1, 1]} : vector<4x8x32xf32> to vector<1x8x32xf32>
    %153 = vector.shape_cast %152 : vector<1x8x32xf32> to vector<8x32xf32>
    %cst_59 = arith.constant dense<0.000000e+00> : vector<16x32xf32>
    %154 = tpu.matmul %151, %153, %cst_59 {dimension_numbers = #tpu.dot_dimension_numbers<[1], [0], [0], [1], [0, 0, 1, 1], [], []>} : vector<16x8xf32>, vector<8x32xf32>, vector<16x32xf32> -> vector<16x32xf32>
    %155 = vector.broadcast %10 : vector<1x32xf32> to vector<16x32xf32>
    %156 = arith.addf %155, %154 : vector<16x32xf32>
    %157 = vector.extract_strided_slice %148 {offsets = [1, 0, 0], sizes = [1, 16, 16], strides = [1, 1, 1]} : vector<4x16x16xf32> to vector<1x16x16xf32>
    %158 = vector.shape_cast %157 : vector<1x16x16xf32> to vector<16x16xf32>
    %cst_60 = arith.constant dense<0.000000e+00> : vector<16x8xf32>
    %159 = tpu.matmul %158, %72, %cst_60 {dimension_numbers = #tpu.dot_dimension_numbers<[1], [0], [0], [1], [0, 0, 1, 1], [], []>} : vector<16x16xf32>, vector<16x8xf32>, vector<16x8xf32> -> vector<16x8xf32>
    %160 = vector.extract_strided_slice %20 {offsets = [1, 0, 0], sizes = [1, 8, 32], strides = [1, 1, 1]} : vector<4x8x32xf32> to vector<1x8x32xf32>
    %161 = vector.shape_cast %160 : vector<1x8x32xf32> to vector<8x32xf32>
    %cst_61 = arith.constant dense<0.000000e+00> : vector<16x32xf32>
    %162 = tpu.matmul %159, %161, %cst_61 {dimension_numbers = #tpu.dot_dimension_numbers<[1], [0], [0], [1], [0, 0, 1, 1], [], []>} : vector<16x8xf32>, vector<8x32xf32>, vector<16x32xf32> -> vector<16x32xf32>
    %163 = arith.addf %156, %162 : vector<16x32xf32>
    %164 = vector.extract_strided_slice %148 {offsets = [2, 0, 0], sizes = [1, 16, 16], strides = [1, 1, 1]} : vector<4x16x16xf32> to vector<1x16x16xf32>
    %165 = vector.shape_cast %164 : vector<1x16x16xf32> to vector<16x16xf32>
    %cst_62 = arith.constant dense<0.000000e+00> : vector<16x8xf32>
    %166 = tpu.matmul %165, %97, %cst_62 {dimension_numbers = #tpu.dot_dimension_numbers<[1], [0], [0], [1], [0, 0, 1, 1], [], []>} : vector<16x16xf32>, vector<16x8xf32>, vector<16x8xf32> -> vector<16x8xf32>
    %167 = vector.extract_strided_slice %20 {offsets = [2, 0, 0], sizes = [1, 8, 32], strides = [1, 1, 1]} : vector<4x8x32xf32> to vector<1x8x32xf32>
    %168 = vector.shape_cast %167 : vector<1x8x32xf32> to vector<8x32xf32>
    %cst_63 = arith.constant dense<0.000000e+00> : vector<16x32xf32>
    %169 = tpu.matmul %166, %168, %cst_63 {dimension_numbers = #tpu.dot_dimension_numbers<[1], [0], [0], [1], [0, 0, 1, 1], [], []>} : vector<16x8xf32>, vector<8x32xf32>, vector<16x32xf32> -> vector<16x32xf32>
    %170 = arith.addf %163, %169 : vector<16x32xf32>
    %171 = vector.extract_strided_slice %148 {offsets = [3, 0, 0], sizes = [1, 16, 16], strides = [1, 1, 1]} : vector<4x16x16xf32> to vector<1x16x16xf32>
    %172 = vector.shape_cast %171 : vector<1x16x16xf32> to vector<16x16xf32>
    %cst_64 = arith.constant dense<0.000000e+00> : vector<16x8xf32>
    %173 = tpu.matmul %172, %122, %cst_64 {dimension_numbers = #tpu.dot_dimension_numbers<[1], [0], [0], [1], [0, 0, 1, 1], [], []>} : vector<16x16xf32>, vector<16x8xf32>, vector<16x8xf32> -> vector<16x8xf32>
    %174 = vector.extract_strided_slice %20 {offsets = [3, 0, 0], sizes = [1, 8, 32], strides = [1, 1, 1]} : vector<4x8x32xf32> to vector<1x8x32xf32>
    %175 = vector.shape_cast %174 : vector<1x8x32xf32> to vector<8x32xf32>
    %cst_65 = arith.constant dense<0.000000e+00> : vector<16x32xf32>
    %176 = tpu.matmul %173, %175, %cst_65 {dimension_numbers = #tpu.dot_dimension_numbers<[1], [0], [0], [1], [0, 0, 1, 1], [], []>} : vector<16x8xf32>, vector<8x32xf32>, vector<16x32xf32> -> vector<16x32xf32>
    %177 = arith.addf %170, %176 : vector<16x32xf32>
    %178 = arith.addf %26, %177 : vector<16x32xf32>
    %cst_66 = arith.constant dense<0.000000e+00> : vector<16xf32>
    %179 = vector.multi_reduction <add>, %178, %cst_66 [1] : vector<16x32xf32> to vector<16xf32>
    %180 = vector.shape_cast %179 : vector<16xf32> to vector<16x1xf32>
    %cst_67 = arith.constant 3.200000e+01 : f32
    %181 = vector.broadcast %cst_67 : f32 to vector<16x1xf32>
    %182 = arith.divf %180, %181 : vector<16x1xf32>
    %183 = vector.broadcast %182 : vector<16x1xf32> to vector<16x32xf32>
    %184 = arith.subf %178, %183 : vector<16x32xf32>
    %185 = arith.mulf %184, %184 : vector<16x32xf32>
    %cst_68 = arith.constant dense<0.000000e+00> : vector<16xf32>
    %186 = vector.multi_reduction <add>, %185, %cst_68 [1] : vector<16x32xf32> to vector<16xf32>
    %187 = vector.shape_cast %186 : vector<16xf32> to vector<16x1xf32>
    %cst_69 = arith.constant 3.200000e+01 : f32
    %188 = vector.broadcast %cst_69 : f32 to vector<16x1xf32>
    %189 = arith.divf %187, %188 : vector<16x1xf32>
    %cst_70 = arith.constant 9.99999974E-6 : f32
    %190 = vector.broadcast %cst_70 : f32 to vector<16x1xf32>
    %191 = arith.addf %189, %190 : vector<16x1xf32>
    %192 = math.rsqrt %191 : vector<16x1xf32>
    %193 = vector.broadcast %192 : vector<16x1xf32> to vector<16x32xf32>
    %194 = arith.mulf %184, %193 : vector<16x32xf32>
    %195 = vector.broadcast %11 : vector<1x32xf32> to vector<16x32xf32>
    %196 = arith.mulf %194, %195 : vector<16x32xf32>
    %197 = vector.broadcast %12 : vector<1x32xf32> to vector<16x32xf32>
    %198 = arith.addf %196, %197 : vector<16x32xf32>
    %cst_71 = arith.constant dense<0.000000e+00> : vector<16x64xf32>
    %199 = tpu.matmul %198, %7, %cst_71 {dimension_numbers = #tpu.dot_dimension_numbers<[1], [0], [0], [1], [0, 0, 1, 1], [], []>} : vector<16x32xf32>, vector<32x64xf32>, vector<16x64xf32> -> vector<16x64xf32>
    %200 = vector.broadcast %8 : vector<1x64xf32> to vector<16x64xf32>
    %201 = arith.addf %199, %200 : vector<16x64xf32>
    %cst_72 = arith.constant 0.000000e+00 : f32
    %202 = vector.broadcast %cst_72 : f32 to vector<16x64xf32>
    %203 = arith.maximumf %201, %202 : vector<16x64xf32>
    %cst_73 = arith.constant dense<0.000000e+00> : vector<16x32xf32>
    %204 = tpu.matmul %203, %4, %cst_73 {dimension_numbers = #tpu.dot_dimension_numbers<[1], [0], [0], [1], [0, 0, 1, 1], [], []>} : vector<16x64xf32>, vector<64x32xf32>, vector<16x32xf32> -> vector<16x32xf32>
    %205 = vector.broadcast %13 : vector<1x32xf32> to vector<16x32xf32>
    %206 = arith.addf %204, %205 : vector<16x32xf32>
    %207 = arith.addf %198, %206 : vector<16x32xf32>
    %cst_74 = arith.constant dense<0.000000e+00> : vector<16xf32>
    %208 = vector.multi_reduction <add>, %207, %cst_74 [1] : vector<16x32xf32> to vector<16xf32>
    %209 = vector.shape_cast %208 : vector<16xf32> to vector<16x1xf32>
    %cst_75 = arith.constant 3.200000e+01 : f32
    %210 = vector.broadcast %cst_75 : f32 to vector<16x1xf32>
    %211 = arith.divf %209, %210 : vector<16x1xf32>
    %212 = vector.broadcast %211 : vector<16x1xf32> to vector<16x32xf32>
    %213 = arith.subf %207, %212 : vector<16x32xf32>
    %214 = arith.mulf %213, %213 : vector<16x32xf32>
    %cst_76 = arith.constant dense<0.000000e+00> : vector<16xf32>
    %215 = vector.multi_reduction <add>, %214, %cst_76 [1] : vector<16x32xf32> to vector<16xf32>
    %216 = vector.shape_cast %215 : vector<16xf32> to vector<16x1xf32>
    %cst_77 = arith.constant 3.200000e+01 : f32
    %217 = vector.broadcast %cst_77 : f32 to vector<16x1xf32>
    %218 = arith.divf %216, %217 : vector<16x1xf32>
    %cst_78 = arith.constant 9.99999974E-6 : f32
    %219 = vector.broadcast %cst_78 : f32 to vector<16x1xf32>
    %220 = arith.addf %218, %219 : vector<16x1xf32>
    %221 = math.rsqrt %220 : vector<16x1xf32>
    %222 = vector.broadcast %221 : vector<16x1xf32> to vector<16x32xf32>
    %223 = arith.mulf %213, %222 : vector<16x32xf32>
    %224 = vector.broadcast %14 : vector<1x32xf32> to vector<16x32xf32>
    %225 = arith.mulf %223, %224 : vector<16x32xf32>
    %226 = vector.broadcast %15 : vector<1x32xf32> to vector<16x32xf32>
    %227 = arith.addf %225, %226 : vector<16x32xf32>
    %c0_79 = arith.constant 0 : index
    %c0_80 = arith.constant 0 : index
    %228 = vector.load %arg9[%c0_79, %c0_80] : memref<16x32xf32, #tpu.memory_space<vmem>>, vector<16x32xf32>
    tpu.vector_store %arg9[%c0_79, %c0_80], %227 {strides = array<i32>} : memref<16x32xf32, #tpu.memory_space<vmem>>, vector<16x32xf32>,
    %cst_81 = arith.constant dense<0.000000e+00> : vector<16x32xf32>
    %229 = tpu.matmul %227, %5, %cst_81 {dimension_numbers = #tpu.dot_dimension_numbers<[1], [0], [0], [1], [0, 0, 1, 1], [], []>} : vector<16x32xf32>, vector<32x32xf32>, vector<16x32xf32> -> vector<16x32xf32>
    %230 = vector.broadcast %16 : vector<1x32xf32> to vector<16x32xf32>
    %231 = arith.addf %229, %230 : vector<16x32xf32>
    %232 = tpu.transpose %231, [1, 0] : vector<16x32xf32> -> vector<32x16xf32>
    %cst_82 = arith.constant dense<0.000000e+00> : vector<1x16xf32>
    %233 = tpu.matmul %6, %232, %cst_82 {dimension_numbers = #tpu.dot_dimension_numbers<[1], [0], [0], [1], [0, 0, 1, 1], [], []>} : vector<1x32xf32>, vector<32x16xf32>, vector<1x16xf32> -> vector<1x16xf32>
    %234 = arith.addf %233, %17 : vector<1x16xf32>
    %c0_83 = arith.constant 0 : index
    %c0_84 = arith.constant 0 : index
    %235 = vector.load %arg10[%c0_83, %c0_84] : memref<1x16xf32, #tpu.memory_space<vmem>>, vector<1x16xf32>
    tpu.vector_store %arg10[%c0_83, %c0_84], %234 {strides = array<i32>} : memref<1x16xf32, #tpu.memory_space<vmem>>, vector<1x16xf32>,
    return
  }
}

</mosaic_0001>

<llo_original>
// kernel: ltr_forward.1
$region0: #{ltr_forward.1}
  #allocation0 [shape = 'u32[]', space=smem, size = 0x4, offset = 0x4, fixed_abs, tag = 'smem constant byte address 0x4 - core index']
  #allocation1 [shape = 'u32[72,128]{1,0:T(1,128)}', space=vmem, size = 0x9000, scoped, tag = 'internal scratch']
  %s0 = inlined_call_operand.vmem [shape: f32[16,16], index: 0, kind: input, shape index: {}]
  %s1 = inlined_call_operand.vmem [shape: f32[16,32], index: 1, kind: input, shape index: {}]
  %s2 = inlined_call_operand.vmem [shape: f32[16,16], index: 2, kind: input, shape index: {}]
  %s3 = inlined_call_operand.vmem [shape: f32[3,4,32,8], index: 3, kind: input, shape index: {}]
  %s4 = inlined_call_operand.vmem [shape: f32[3,4,1,8], index: 4, kind: input, shape index: {}]
  %s5 = inlined_call_operand.vmem [shape: f32[4,8,32], index: 5, kind: input, shape index: {}]
  %s6 = inlined_call_operand.vmem [shape: f32[33,64], index: 6, kind: input, shape index: {}]
  %s7 = inlined_call_operand.vmem [shape: f32[113,32], index: 7, kind: input, shape index: {}]
  %s8 = inlined_call_operand.vmem [shape: f32[9,32], index: 8, kind: input, shape index: {}]
  %s9 = inlined_call_operand.hbm [shape: f32[16,32], index: 9, kind: output, shape index: {0}]
  %s10 = inlined_call_operand.vmem [shape: f32[1,16], index: 10, kind: output, shape index: {1}]
  %11 = xla_tuple %s9, %s10
  %s12 = sld [smem:[#allocation0]]
  $region54: #{ltr_forward.1} parent=0
    _
  %s14 = ssub.s32 1, %s12
  %s15 = scalar_select 0, %s14, %s12
  $region1: #{ltr_forward.1} parent=0
    #allocation2 [shape = 'u8[8192]{0}', space=vmem, size = 0x2000, scoped, tag = 'output window, operand 0, single buffered']
    #allocation3 [shape = 's32[1]{0}', space=sflag, size = 0x4, scoped, tag = 'scoped memory for ltr_forward.1']
    %16 = vsyncpa [#allocation3], 0
    // Predicated region
    $region2: #{ltr_forward.1} parent=1 // pred_check
      _
    $region3: #{ltr_forward.1} parent=1 // pred_check_branch
      %18 = sbr.rel (0) target = $region5
    $region4: #{ltr_forward.1} parent=1 // pred_region
      _
    $region5: #{ltr_forward.1} parent=1 // pred_fallthru
      _
    // Predicated region
    $region6: #{ltr_forward.1} parent=1 // pred_check
      _
    $region7: #{ltr_forward.1} parent=1 // pred_check_branch
      %20 = sbr.rel (0) target = $region9
    $region8: #{ltr_forward.1} parent=1 // pred_region
      _
    $region9: #{ltr_forward.1} parent=1 // pred_fallthru
      _
    // Predicated region
    $region10: #{ltr_forward.1} parent=1 // pred_check
      _
    $region11: #{ltr_forward.1} parent=1 // pred_check_branch
      %22 = sbr.rel (0) target = $region13
    $region12: #{ltr_forward.1} parent=1 // pred_region
      _
    $region13: #{ltr_forward.1} parent=1 // pred_fallthru
      _
    // Predicated region
    $region14: #{ltr_forward.1} parent=1 // pred_check
      _
    $region15: #{ltr_forward.1} parent=1 // pred_check_branch
      %24 = sbr.rel (0) target = $region17
    $region16: #{ltr_forward.1} parent=1 // pred_region
      _
    $region17: #{ltr_forward.1} parent=1 // pred_fallthru
      _
    // Predicated region
    $region18: #{ltr_forward.1} parent=1 // pred_check
      _
    $region19: #{ltr_forward.1} parent=1 // pred_check_branch
      %26 = sbr.rel (0) target = $region21
    $region20: #{ltr_forward.1} parent=1 // pred_region
      _
    $region21: #{ltr_forward.1} parent=1 // pred_fallthru
      _
    // Predicated region
    $region22: #{ltr_forward.1} parent=1 // pred_check
      _
    $region23: #{ltr_forward.1} parent=1 // pred_check_branch
      %28 = sbr.rel (0) target = $region25
    $region24: #{ltr_forward.1} parent=1 // pred_region
      _
    $region25: #{ltr_forward.1} parent=1 // pred_fallthru
      _
    // Predicated region
    $region26: #{ltr_forward.1} parent=1 // pred_check
      _
    $region27: #{ltr_forward.1} parent=1 // pred_check_branch
      %30 = sbr.rel (0) target = $region29
    $region28: #{ltr_forward.1} parent=1 // pred_region
      _
    $region29: #{ltr_forward.1} parent=1 // pred_fallthru
      _
    // Predicated region
    $region30: #{ltr_forward.1} parent=1 // pred_check
      _
    $region31: #{ltr_forward.1} parent=1 // pred_check_branch
      %32 = sbr.rel (0) target = $region33
    $region32: #{ltr_forward.1} parent=1 // pred_region
      _
    $region33: #{ltr_forward.1} parent=1 // pred_fallthru
      _
    // Predicated region
    $region34: #{ltr_forward.1} parent=1 // pred_check
      _
    $region35: #{ltr_forward.1} parent=1 // pred_check_branch
      %34 = sbr.rel (0) target = $region37
    $region36: #{ltr_forward.1} parent=1 // pred_region
      _
    $region37: #{ltr_forward.1} parent=1 // pred_fallthru
      _
    %v35 = vld [vmem:[%s0] sm:$0xff]
    %v36 = vld [vmem:[%s0 + $0x8] sm:$0xff]
    %v37 = vld [vmem:[%s1] sm:$0xff]
    %v38 = vld [vmem:[%s1 + $0x8] sm:$0xff]
    %v39 = vld [vmem:[%s2] sm:$0xff]
    %v40 = vld [vmem:[%s2 + $0x8] sm:$0xff]
    %v41 = vld [vmem:[%s7] sm:$0xff]
    %v42 = vld [vmem:[%s7 + $0x8] sm:$0xff]
    %v43 = vld [vmem:[%s7 + $0x10] sm:$0xff]
    %v44 = vld [vmem:[%s7 + $0x18] sm:$0xff]
    %v45 = vld [vmem:[%s7 + $0x20] sm:$0xff]
    %v46 = vld [vmem:[%s7 + $0x28] sm:$0xff]
    %v47 = vld [vmem:[%s7 + $0x30] sm:$0xff]
    %v48 = vld [vmem:[%s7 + $0x38] sm:$0xff]
    %v49 = vld [vmem:[%s7 + $0x40] sm:$0xff]
    %v50 = vld [vmem:[%s7 + $0x48] sm:$0xff]
    %v51 = vld [vmem:[%s7 + $0x50] sm:$0xff]
    %v52 = vld [vmem:[%s7 + $0x58] sm:$0xff]
    %v53 = vld [vmem:[%s7 + $0x60] sm:$0xff]
    %v54 = vld [vmem:[%s7 + $0x68] sm:$0xff]
    %v55 = vld [vmem:[%s7 + $0x70] sm:$0x1]
    %v56 = vld [vmem:[%s6] sm:$0xff]
    %v57 = vld [vmem:[%s6 + $0x8] sm:$0xff]
    %v58 = vld [vmem:[%s6 + $0x10] sm:$0xff]
    %v59 = vld [vmem:[%s6 + $0x18] sm:$0xff]
    %v60 = vld [vmem:[%s6 + $0x20] sm:$0x1]
    %v61 = vld [vmem:[%s8] sm:$0x1]
    %v62 = vld [vmem:[%s8 + $0x1] sm:$0x1]
    %v63 = vld [vmem:[%s8 + $0x2] sm:$0x1]
    %v64 = vld [vmem:[%s8 + $0x3] sm:$0x1]
    %v65 = vld [vmem:[%s8 + $0x4] sm:$0x1]
    %v66 = vld [vmem:[%s8 + $0x5] sm:$0x1]
    %v67 = vld [vmem:[%s8 + $0x6] sm:$0x1]
    %v68 = vld [vmem:[%s8 + $0x7] sm:$0x1]
    %v69 = vld [vmem:[%s8 + $0x8] sm:$0x1]
    %v70 = vld [vmem:[%s3] sm:$0xff]
    %v71 = vld [vmem:[%s3 + $0x8] sm:$0xff]
    %v72 = vld [vmem:[%s3 + $0x10] sm:$0xff]
    %v73 = vld [vmem:[%s3 + $0x18] sm:$0xff]
    %v74 = vld [vmem:[%s3 + $0x20] sm:$0xff]
    %v75 = vld [vmem:[%s3 + $0x28] sm:$0xff]
    %v76 = vld [vmem:[%s3 + $0x30] sm:$0xff]
    %v77 = vld [vmem:[%s3 + $0x38] sm:$0xff]
    %v78 = vld [vmem:[%s3 + $0x40] sm:$0xff]
    %v79 = vld [vmem:[%s3 + $0x48] sm:$0xff]
    %v80 = vld [vmem:[%s3 + $0x50] sm:$0xff]
    %v81 = vld [vmem:[%s3 + $0x58] sm:$0xff]
    %v82 = vld [vmem:[%s3 + $0x60] sm:$0xff]
    %v83 = vld [vmem:[%s3 + $0x68] sm:$0xff]
    %v84 = vld [vmem:[%s3 + $0x70] sm:$0xff]
    %v85 = vld [vmem:[%s3 + $0x78] sm:$0xff]
    %v86 = vld [vmem:[%s3 + $0x80] sm:$0xff]
    %v87 = vld [vmem:[%s3 + $0x88] sm:$0xff]
    %v88 = vld [vmem:[%s3 + $0x90] sm:$0xff]
    %v89 = vld [vmem:[%s3 + $0x98] sm:$0xff]
    %v90 = vld [vmem:[%s3 + $0xa0] sm:$0xff]
    %v91 = vld [vmem:[%s3 + $0xa8] sm:$0xff]
    %v92 = vld [vmem:[%s3 + $0xb0] sm:$0xff]
    %v93 = vld [vmem:[%s3 + $0xb8] sm:$0xff]
    %v94 = vld [vmem:[%s3 + $0xc0] sm:$0xff]
    %v95 = vld [vmem:[%s3 + $0xc8] sm:$0xff]
    %v96 = vld [vmem:[%s3 + $0xd0] sm:$0xff]
    %v97 = vld [vmem:[%s3 + $0xd8] sm:$0xff]
    %v98 = vld [vmem:[%s3 + $0xe0] sm:$0xff]
    %v99 = vld [vmem:[%s3 + $0xe8] sm:$0xff]
    %v100 = vld [vmem:[%s3 + $0xf0] sm:$0xff]
    %v101 = vld [vmem:[%s3 + $0xf8] sm:$0xff]
    %v102 = vld [vmem:[%s3 + $0x100] sm:$0xff]
    %v103 = vld [vmem:[%s3 + $0x108] sm:$0xff]
    %v104 = vld [vmem:[%s3 + $0x110] sm:$0xff]
    %v105 = vld [vmem:[%s3 + $0x118] sm:$0xff]
    %v106 = vld [vmem:[%s3 + $0x120] sm:$0xff]
    %v107 = vld [vmem:[%s3 + $0x128] sm:$0xff]
    %v108 = vld [vmem:[%s3 + $0x130] sm:$0xff]
    %v109 = vld [vmem:[%s3 + $0x138] sm:$0xff]
    %v110 = vld [vmem:[%s3 + $0x140] sm:$0xff]
    %v111 = vld [vmem:[%s3 + $0x148] sm:$0xff]
    %v112 = vld [vmem:[%s3 + $0x150] sm:$0xff]
    %v113 = vld [vmem:[%s3 + $0x158] sm:$0xff]
    %v114 = vld [vmem:[%s3 + $0x160] sm:$0xff]
    %v115 = vld [vmem:[%s3 + $0x168] sm:$0xff]
    %v116 = vld [vmem:[%s3 + $0x170] sm:$0xff]
    %v117 = vld [vmem:[%s3 + $0x178] sm:$0xff]
    %v118 = vld [vmem:[%s4] sm:$0x1]
    %v119 = vld [vmem:[%s4 + $0x1] sm:$0x1]
    %v120 = vld [vmem:[%s4 + $0x2] sm:$0x1]
    %v121 = vld [vmem:[%s4 + $0x3] sm:$0x1]
    %v122 = vld [vmem:[%s4 + $0x4] sm:$0x1]
    %v123 = vld [vmem:[%s4 + $0x5] sm:$0x1]
    %v124 = vld [vmem:[%s4 + $0x6] sm:$0x1]
    %v125 = vld [vmem:[%s4 + $0x7] sm:$0x1]
    %v126 = vld [vmem:[%s4 + $0x8] sm:$0x1]
    %v127 = vld [vmem:[%s4 + $0x9] sm:$0x1]
    %v128 = vld [vmem:[%s4 + $0xa] sm:$0x1]
    %v129 = vld [vmem:[%s4 + $0xb] sm:$0x1]
    %v130 = vld [vmem:[%s5] sm:$0xff]
    %v131 = vld [vmem:[%s5 + $0x8] sm:$0xff]
    %v132 = vld [vmem:[%s5 + $0x10] sm:$0xff]
    %v133 = vld [vmem:[%s5 + $0x18] sm:$0xff]
    %v134 = vperm.slane %v61, 0
    %vm135 = vcmask 130048
    %v137 = vsel %vm135, %v35, 0
    %v140 = vsel %vm135, %v36, 0
    %142 = vmatpush.msra.mxu0 0.0
    %143 = vmatpush.msra.mxu0 0.0
    %144 = vmatpush.msra.mxu0 0.0
    %145 = vmatpush.msra.mxu0 0.0
    %146 = vmatpush.msra.mxu0 0.0
    %147 = vmatpush.msra.mxu0 0.0
    %148 = vmatpush.msra.mxu0 0.0
    %149 = vmatpush.msra.mxu0 0.0
    %150 = vmatpush.msra.mxu0 0.0
    %151 = vmatpush.msra.mxu0 0.0
    %152 = vmatpush.msra.mxu0 0.0
    %153 = vmatpush.msra.mxu0 0.0
    %154 = vmatpush.msra.mxu0 0.0
    %155 = vmatpush.msra.mxu0 0.0
    %156 = vmatpush.msra.mxu0 %v42
    %157 = vmatpush.msra.mxu0 %v41
    %158 = vmatmul.f32.gmra.mxu0 %v137
    %v159 = vpop.f32.mrf.mxu0
    %v160 = vadd.f32 %v134, %v159
    %161 = vmatmul.f32.gmra.mxu0 %v140
    %v162 = vpop.f32.mrf.mxu0
    %v163 = vadd.f32 %v134, %v162
    %164 = vdwg.mxu0
    %v165 = vmax.f32 %v160, 0.0
    %v166 = vmax.f32 %v163, 0.0
    %v167 = vadd.f32 %v165, %v37
    %v168 = vadd.f32 %v166, %v38
    %v170 = vperm.slane %v118, 0
    %vm172 = vcmask 261120
    %v174 = vsel %vm172, %v167, 0
    %v177 = vsel %vm172, %v168, 0
    %179 = vmatpush.msra.mxu0 0.0
    %180 = vmatpush.msra.mxu0 0.0
    %181 = vmatpush.msra.mxu0 0.0
    %182 = vmatpush.msra.mxu0 0.0
    %183 = vmatpush.msra.mxu0 0.0
    %184 = vmatpush.msra.mxu0 0.0
    %185 = vmatpush.msra.mxu0 0.0
    %186 = vmatpush.msra.mxu0 0.0
    %187 = vmatpush.msra.mxu0 0.0
    %188 = vmatpush.msra.mxu0 0.0
    %189 = vmatpush.msra.mxu0 0.0
    %190 = vmatpush.msra.mxu0 0.0
    %191 = vmatpush.msra.mxu0 %v73
    %192 = vmatpush.msra.mxu0 %v72
    %193 = vmatpush.msra.mxu0 %v71
    %194 = vmatpush.msra.mxu0 %v70
    %195 = vmatmul.f32.gmra.mxu0 %v174
    %v196 = vpop.f32.mrf.mxu0
    %v197 = vadd.f32 %v170, %v196
    %198 = vmatmul.f32.gmra.mxu0 %v177
    %v199 = vpop.f32.mrf.mxu0
    %v200 = vadd.f32 %v170, %v199
    %201 = vdwg.mxu0
    %v203 = vperm.slane %v122, 0
    %205 = vmatpush.msra.mxu0 0.0
    %206 = vmatpush.msra.mxu0 0.0
    %207 = vmatpush.msra.mxu0 0.0
    %208 = vmatpush.msra.mxu0 0.0
    %209 = vmatpush.msra.mxu0 0.0
    %210 = vmatpush.msra.mxu0 0.0
    %211 = vmatpush.msra.mxu0 0.0
    %212 = vmatpush.msra.mxu0 0.0
    %213 = vmatpush.msra.mxu0 0.0
    %214 = vmatpush.msra.mxu0 0.0
    %215 = vmatpush.msra.mxu0 0.0
    %216 = vmatpush.msra.mxu0 0.0
    %217 = vmatpush.msra.mxu0 %v89
    %218 = vmatpush.msra.mxu0 %v88
    %219 = vmatpush.msra.mxu0 %v87
    %220 = vmatpush.msra.mxu0 %v86
    %221 = vmatmul.f32.gmra.mxu0 %v174
    %v222 = vpop.f32.mrf.mxu0
    %v223 = vadd.f32 %v203, %v222
    %224 = vmatmul.f32.gmra.mxu0 %v177
    %v225 = vpop.f32.mrf.mxu0
    %v226 = vadd.f32 %v203, %v225
    %227 = vdwg.mxu0
    %v229 = vperm.slane %v126, 0
    %231 = vmatpush.msra.mxu0 0.0
    %232 = vmatpush.msra.mxu0 0.0
    %233 = vmatpush.msra.mxu0 0.0
    %234 = vmatpush.msra.mxu0 0.0
    %235 = vmatpush.msra.mxu0 0.0
    %236 = vmatpush.msra.mxu0 0.0
    %237 = vmatpush.msra.mxu0 0.0
    %238 = vmatpush.msra.mxu0 0.0
    %239 = vmatpush.msra.mxu0 0.0
    %240 = vmatpush.msra.mxu0 0.0
    %241 = vmatpush.msra.mxu0 0.0
    %242 = vmatpush.msra.mxu0 0.0
    %243 = vmatpush.msra.mxu0 %v105
    %244 = vmatpush.msra.mxu0 %v104
    %245 = vmatpush.msra.mxu0 %v103
    %246 = vmatpush.msra.mxu0 %v102
    %247 = vmatmul.f32.gmra.mxu0 %v174
    %v248 = vpop.f32.mrf.mxu0
    %v249 = vadd.f32 %v229, %v248
    %250 = vmatmul.f32.gmra.mxu0 %v177
    %v251 = vpop.f32.mrf.mxu0
    %v252 = vadd.f32 %v229, %v251
    %253 = vdwg.mxu0
    %vm254 = vcmask 64512
    %v256 = vsel %vm254, %v197, 0
    %v259 = vsel %vm254, %v200, 0
    %v262 = vsel %vm254, %v223, 0
    %v265 = vsel %vm254, %v226, 0
    %267 = vmatpush.xpose.msra.mxu0 0.0
    %268 = vmatpush.xpose.msra.mxu0 0.0
    %269 = vmatpush.xpose.msra.mxu0 0.0
    %270 = vmatpush.xpose.msra.mxu0 0.0
    %271 = vmatpush.xpose.msra.mxu0 0.0
    %272 = vmatpush.xpose.msra.mxu0 0.0
    %273 = vmatpush.xpose.msra.mxu0 0.0
    %274 = vmatpush.xpose.msra.mxu0 0.0
    %275 = vmatpush.xpose.msra.mxu0 0.0
    %276 = vmatpush.xpose.msra.mxu0 0.0
    %277 = vmatpush.xpose.msra.mxu0 0.0
    %278 = vmatpush.xpose.msra.mxu0 0.0
    %279 = vmatpush.xpose.msra.mxu0 0.0
    %280 = vmatpush.xpose.msra.mxu0 0.0
    %281 = vmatpush.xpose.msra.mxu0 %v265
    %282 = vmatpush.xpose.msra.mxu0 %v262
    %283 = vmatmul.f32.gmra.mxu0 %v256
    %v284 = vpop.f32.mrf.mxu0
    %v285 = vadd.f32 0.0, %v284
    %286 = vmatmul.f32.gmra.mxu0 %v259
    %v287 = vpop.f32.mrf.mxu0
    %v288 = vadd.f32 0.0, %v287
    %289 = vdwg.mxu0
    %v290 = vmul.f32 %v285, 0.35355338
    %v291 = vmul.f32 %v288, 0.35355338
    %v293 = vperm.slane %v119, 0
    %295 = vmatpush.msra.mxu0 0.0
    %296 = vmatpush.msra.mxu0 0.0
    %297 = vmatpush.msra.mxu0 0.0
    %298 = vmatpush.msra.mxu0 0.0
    %299 = vmatpush.msra.mxu0 0.0
    %300 = vmatpush.msra.mxu0 0.0
    %301 = vmatpush.msra.mxu0 0.0
    %302 = vmatpush.msra.mxu0 0.0
    %303 = vmatpush.msra.mxu0 0.0
    %304 = vmatpush.msra.mxu0 0.0
    %305 = vmatpush.msra.mxu0 0.0
    %306 = vmatpush.msra.mxu0 0.0
    %307 = vmatpush.msra.mxu0 %v77
    %308 = vmatpush.msra.mxu0 %v76
    %309 = vmatpush.msra.mxu0 %v75
    %310 = vmatpush.msra.mxu0 %v74
    %311 = vmatmul.f32.gmra.mxu0 %v174
    %v312 = vpop.f32.mrf.mxu0
    %v313 = vadd.f32 %v293, %v312
    %314 = vmatmul.f32.gmra.mxu0 %v177
    %v315 = vpop.f32.mrf.mxu0
    %v316 = vadd.f32 %v293, %v315
    %317 = vdwg.mxu0
    %v319 = vperm.slane %v123, 0
    %321 = vmatpush.msra.mxu0 0.0
    %322 = vmatpush.msra.mxu0 0.0
    %323 = vmatpush.msra.mxu0 0.0
    %324 = vmatpush.msra.mxu0 0.0
    %325 = vmatpush.msra.mxu0 0.0
    %326 = vmatpush.msra.mxu0 0.0
    %327 = vmatpush.msra.mxu0 0.0
    %328 = vmatpush.msra.mxu0 0.0
    %329 = vmatpush.msra.mxu0 0.0
    %330 = vmatpush.msra.mxu0 0.0
    %331 = vmatpush.msra.mxu0 0.0
    %332 = vmatpush.msra.mxu0 0.0
    %333 = vmatpush.msra.mxu0 %v93
    %334 = vmatpush.msra.mxu0 %v92
    %335 = vmatpush.msra.mxu0 %v91
    %336 = vmatpush.msra.mxu0 %v90
    %337 = vmatmul.f32.gmra.mxu0 %v174
    %v338 = vpop.f32.mrf.mxu0
    %v339 = vadd.f32 %v319, %v338
    %340 = vmatmul.f32.gmra.mxu0 %v177
    %v341 = vpop.f32.mrf.mxu0
    %v342 = vadd.f32 %v319, %v341
    %343 = vdwg.mxu0
    %v345 = vperm.slane %v127, 0
    %347 = vmatpush.msra.mxu0 0.0
    %348 = vmatpush.msra.mxu0 0.0
    %349 = vmatpush.msra.mxu0 0.0
    %350 = vmatpush.msra.mxu0 0.0
    %351 = vmatpush.msra.mxu0 0.0
    %352 = vmatpush.msra.mxu0 0.0
    %353 = vmatpush.msra.mxu0 0.0
    %354 = vmatpush.msra.mxu0 0.0
    %355 = vmatpush.msra.mxu0 0.0
    %356 = vmatpush.msra.mxu0 0.0
    %357 = vmatpush.msra.mxu0 0.0
    %358 = vmatpush.msra.mxu0 0.0
    %359 = vmatpush.msra.mxu0 %v109
    %360 = vmatpush.msra.mxu0 %v108
    %361 = vmatpush.msra.mxu0 %v107
    %362 = vmatpush.msra.mxu0 %v106
    %363 = vmatmul.f32.gmra.mxu0 %v174
    %v364 = vpop.f32.mrf.mxu0
    %v365 = vadd.f32 %v345, %v364
    %366 = vmatmul.f32.gmra.mxu0 %v177
    %v367 = vpop.f32.mrf.mxu0
    %v368 = vadd.f32 %v345, %v367
    %369 = vdwg.mxu0
    %v371 = vsel %vm254, %v313, 0
    %v374 = vsel %vm254, %v316, 0
    %v377 = vsel %vm254, %v339, 0
    %v380 = vsel %vm254, %v342, 0
    %382 = vmatpush.xpose.msra.mxu0 0.0
    %383 = vmatpush.xpose.msra.mxu0 0.0
    %384 = vmatpush.xpose.msra.mxu0 0.0
    %385 = vmatpush.xpose.msra.mxu0 0.0
    %386 = vmatpush.xpose.msra.mxu0 0.0
    %387 = vmatpush.xpose.msra.mxu0 0.0
    %388 = vmatpush.xpose.msra.mxu0 0.0
    %389 = vmatpush.xpose.msra.mxu0 0.0
    %390 = vmatpush.xpose.msra.mxu0 0.0
    %391 = vmatpush.xpose.msra.mxu0 0.0
    %392 = vmatpush.xpose.msra.mxu0 0.0
    %393 = vmatpush.xpose.msra.mxu0 0.0
    %394 = vmatpush.xpose.msra.mxu0 0.0
    %395 = vmatpush.xpose.msra.mxu0 0.0
    %396 = vmatpush.xpose.msra.mxu0 %v380
    %397 = vmatpush.xpose.msra.mxu0 %v377
    %398 = vmatmul.f32.gmra.mxu0 %v371
    %v399 = vpop.f32.mrf.mxu0
    %v400 = vadd.f32 0.0, %v399
    %401 = vmatmul.f32.gmra.mxu0 %v374
    %v402 = vpop.f32.mrf.mxu0
    %v403 = vadd.f32 0.0, %v402
    %404 = vdwg.mxu0
    %v405 = vmul.f32 %v400, 0.35355338
    %v406 = vmul.f32 %v403, 0.35355338
    %v408 = vperm.slane %v120, 0
    %410 = vmatpush.msra.mxu0 0.0
    %411 = vmatpush.msra.mxu0 0.0
    %412 = vmatpush.msra.mxu0 0.0
    %413 = vmatpush.msra.mxu0 0.0
    %414 = vmatpush.msra.mxu0 0.0
    %415 = vmatpush.msra.mxu0 0.0
    %416 = vmatpush.msra.mxu0 0.0
    %417 = vmatpush.msra.mxu0 0.0
    %418 = vmatpush.msra.mxu0 0.0
    %419 = vmatpush.msra.mxu0 0.0
    %420 = vmatpush.msra.mxu0 0.0
    %421 = vmatpush.msra.mxu0 0.0
    %422 = vmatpush.msra.mxu0 %v81
    %423 = vmatpush.msra.mxu0 %v80
    %424 = vmatpush.msra.mxu0 %v79
    %425 = vmatpush.msra.mxu0 %v78
    %426 = vmatmul.f32.gmra.mxu0 %v174
    %v427 = vpop.f32.mrf.mxu0
    %v428 = vadd.f32 %v408, %v427
    %429 = vmatmul.f32.gmra.mxu0 %v177
    %v430 = vpop.f32.mrf.mxu0
    %v431 = vadd.f32 %v408, %v430
    %432 = vdwg.mxu0
    %v434 = vperm.slane %v124, 0
    %436 = vmatpush.msra.mxu0 0.0
    %437 = vmatpush.msra.mxu0 0.0
    %438 = vmatpush.msra.mxu0 0.0
    %439 = vmatpush.msra.mxu0 0.0
    %440 = vmatpush.msra.mxu0 0.0
    %441 = vmatpush.msra.mxu0 0.0
    %442 = vmatpush.msra.mxu0 0.0
    %443 = vmatpush.msra.mxu0 0.0
    %444 = vmatpush.msra.mxu0 0.0
    %445 = vmatpush.msra.mxu0 0.0
    %446 = vmatpush.msra.mxu0 0.0
    %447 = vmatpush.msra.mxu0 0.0
    %448 = vmatpush.msra.mxu0 %v97
    %449 = vmatpush.msra.mxu0 %v96
    %450 = vmatpush.msra.mxu0 %v95
    %451 = vmatpush.msra.mxu0 %v94
    %452 = vmatmul.f32.gmra.mxu0 %v174
    %v453 = vpop.f32.mrf.mxu0
    %v454 = vadd.f32 %v434, %v453
    %455 = vmatmul.f32.gmra.mxu0 %v177
    %v456 = vpop.f32.mrf.mxu0
    %v457 = vadd.f32 %v434, %v456
    %458 = vdwg.mxu0
    %v460 = vperm.slane %v128, 0
    %462 = vmatpush.msra.mxu0 0.0
    %463 = vmatpush.msra.mxu0 0.0
    %464 = vmatpush.msra.mxu0 0.0
    %465 = vmatpush.msra.mxu0 0.0
    %466 = vmatpush.msra.mxu0 0.0
    %467 = vmatpush.msra.mxu0 0.0
    %468 = vmatpush.msra.mxu0 0.0
    %469 = vmatpush.msra.mxu0 0.0
    %470 = vmatpush.msra.mxu0 0.0
    %471 = vmatpush.msra.mxu0 0.0
    %472 = vmatpush.msra.mxu0 0.0
    %473 = vmatpush.msra.mxu0 0.0
    %474 = vmatpush.msra.mxu0 %v113
    %475 = vmatpush.msra.mxu0 %v112
    %476 = vmatpush.msra.mxu0 %v111
    %477 = vmatpush.msra.mxu0 %v110
    %478 = vmatmul.f32.gmra.mxu0 %v174
    %v479 = vpop.f32.mrf.mxu0
    %v480 = vadd.f32 %v460, %v479
    %481 = vmatmul.f32.gmra.mxu0 %v177
    %v482 = vpop.f32.mrf.mxu0
    %v483 = vadd.f32 %v460, %v482
    %484 = vdwg.mxu0
    %v486 = vsel %vm254, %v428, 0
    %v489 = vsel %vm254, %v431, 0
    %v492 = vsel %vm254, %v454, 0
    %v495 = vsel %vm254, %v457, 0
    %497 = vmatpush.xpose.msra.mxu0 0.0
    %498 = vmatpush.xpose.msra.mxu0 0.0
    %499 = vmatpush.xpose.msra.mxu0 0.0
    %500 = vmatpush.xpose.msra.mxu0 0.0
    %501 = vmatpush.xpose.msra.mxu0 0.0
    %502 = vmatpush.xpose.msra.mxu0 0.0
    %503 = vmatpush.xpose.msra.mxu0 0.0
    %504 = vmatpush.xpose.msra.mxu0 0.0
    %505 = vmatpush.xpose.msra.mxu0 0.0
    %506 = vmatpush.xpose.msra.mxu0 0.0
    %507 = vmatpush.xpose.msra.mxu0 0.0
    %508 = vmatpush.xpose.msra.mxu0 0.0
    %509 = vmatpush.xpose.msra.mxu0 0.0
    %510 = vmatpush.xpose.msra.mxu0 0.0
    %511 = vmatpush.xpose.msra.mxu0 %v495
    %512 = vmatpush.xpose.msra.mxu0 %v492
    %513 = vmatmul.f32.gmra.mxu0 %v486
    %v514 = vpop.f32.mrf.mxu0
    %v515 = vadd.f32 0.0, %v514
    %516 = vmatmul.f32.gmra.mxu0 %v489
    %v517 = vpop.f32.mrf.mxu0
    %v518 = vadd.f32 0.0, %v517
    %519 = vdwg.mxu0
    %v520 = vmul.f32 %v515, 0.35355338
    %v521 = vmul.f32 %v518, 0.35355338
    %v523 = vperm.slane %v121, 0
    %525 = vmatpush.msra.mxu0 0.0
    %526 = vmatpush.msra.mxu0 0.0
    %527 = vmatpush.msra.mxu0 0.0
    %528 = vmatpush.msra.mxu0 0.0
    %529 = vmatpush.msra.mxu0 0.0
    %530 = vmatpush.msra.mxu0 0.0
    %531 = vmatpush.msra.mxu0 0.0
    %532 = vmatpush.msra.mxu0 0.0
    %533 = vmatpush.msra.mxu0 0.0
    %534 = vmatpush.msra.mxu0 0.0
    %535 = vmatpush.msra.mxu0 0.0
    %536 = vmatpush.msra.mxu0 0.0
    %537 = vmatpush.msra.mxu0 %v85
    %538 = vmatpush.msra.mxu0 %v84
    %539 = vmatpush.msra.mxu0 %v83
    %540 = vmatpush.msra.mxu0 %v82
    %541 = vmatmul.f32.gmra.mxu0 %v174
    %v542 = vpop.f32.mrf.mxu0
    %v543 = vadd.f32 %v523, %v542
    %544 = vmatmul.f32.gmra.mxu0 %v177
    %v545 = vpop.f32.mrf.mxu0
    %v546 = vadd.f32 %v523, %v545
    %547 = vdwg.mxu0
    %v549 = vperm.slane %v125, 0
    %551 = vmatpush.msra.mxu0 0.0
    %552 = vmatpush.msra.mxu0 0.0
    %553 = vmatpush.msra.mxu0 0.0
    %554 = vmatpush.msra.mxu0 0.0
    %555 = vmatpush.msra.mxu0 0.0
    %556 = vmatpush.msra.mxu0 0.0
    %557 = vmatpush.msra.mxu0 0.0
    %558 = vmatpush.msra.mxu0 0.0
    %559 = vmatpush.msra.mxu0 0.0
    %560 = vmatpush.msra.mxu0 0.0
    %561 = vmatpush.msra.mxu0 0.0
    %562 = vmatpush.msra.mxu0 0.0
    %563 = vmatpush.msra.mxu0 %v101
    %564 = vmatpush.msra.mxu0 %v100
    %565 = vmatpush.msra.mxu0 %v99
    %566 = vmatpush.msra.mxu0 %v98
    %567 = vmatmul.f32.gmra.mxu0 %v174
    %v568 = vpop.f32.mrf.mxu0
    %v569 = vadd.f32 %v549, %v568
    %570 = vmatmul.f32.gmra.mxu0 %v177
    %v571 = vpop.f32.mrf.mxu0
    %v572 = vadd.f32 %v549, %v571
    %573 = vdwg.mxu0
    %v575 = vperm.slane %v129, 0
    %577 = vmatpush.msra.mxu0 0.0
    %578 = vmatpush.msra.mxu0 0.0
    %579 = vmatpush.msra.mxu0 0.0
    %580 = vmatpush.msra.mxu0 0.0
    %581 = vmatpush.msra.mxu0 0.0
    %582 = vmatpush.msra.mxu0 0.0
    %583 = vmatpush.msra.mxu0 0.0
    %584 = vmatpush.msra.mxu0 0.0
    %585 = vmatpush.msra.mxu0 0.0
    %586 = vmatpush.msra.mxu0 0.0
    %587 = vmatpush.msra.mxu0 0.0
    %588 = vmatpush.msra.mxu0 0.0
    %589 = vmatpush.msra.mxu0 %v117
    %590 = vmatpush.msra.mxu0 %v116
    %591 = vmatpush.msra.mxu0 %v115
    %592 = vmatpush.msra.mxu0 %v114
    %593 = vmatmul.f32.gmra.mxu0 %v174
    %v594 = vpop.f32.mrf.mxu0
    %v595 = vadd.f32 %v575, %v594
    %596 = vmatmul.f32.gmra.mxu0 %v177
    %v597 = vpop.f32.mrf.mxu0
    %v598 = vadd.f32 %v575, %v597
    %599 = vdwg.mxu0
    %v601 = vsel %vm254, %v543, 0
    %v604 = vsel %vm254, %v546, 0
    %v607 = vsel %vm254, %v569, 0
    %v610 = vsel %vm254, %v572, 0
    %612 = vmatpush.xpose.msra.mxu0 0.0
    %613 = vmatpush.xpose.msra.mxu0 0.0
    %614 = vmatpush.xpose.msra.mxu0 0.0
    %615 = vmatpush.xpose.msra.mxu0 0.0
    %616 = vmatpush.xpose.msra.mxu0 0.0
    %617 = vmatpush.xpose.msra.mxu0 0.0
    %618 = vmatpush.xpose.msra.mxu0 0.0
    %619 = vmatpush.xpose.msra.mxu0 0.0
    %620 = vmatpush.xpose.msra.mxu0 0.0
    %621 = vmatpush.xpose.msra.mxu0 0.0
    %622 = vmatpush.xpose.msra.mxu0 0.0
    %623 = vmatpush.xpose.msra.mxu0 0.0
    %624 = vmatpush.xpose.msra.mxu0 0.0
    %625 = vmatpush.xpose.msra.mxu0 0.0
    %626 = vmatpush.xpose.msra.mxu0 %v610
    %627 = vmatpush.xpose.msra.mxu0 %v607
    %628 = vmatmul.f32.gmra.mxu0 %v601
    %v629 = vpop.f32.mrf.mxu0
    %v630 = vadd.f32 0.0, %v629
    %631 = vmatmul.f32.gmra.mxu0 %v604
    %v632 = vpop.f32.mrf.mxu0
    %v633 = vadd.f32 0.0, %v632
    %634 = vdwg.mxu0
    %v635 = vmul.f32 %v630, 0.35355338
    %v636 = vmul.f32 %v633, 0.35355338
    %v637 = vadd.f32 %v290, %v39
    %v638 = vadd.f32 %v291, %v40
    %v639 = vadd.f32 %v405, %v39
    %v640 = vadd.f32 %v406, %v40
    %v641 = vadd.f32 %v520, %v39
    %v642 = vadd.f32 %v521, %v40
    %v643 = vadd.f32 %v635, %v39
    %v644 = vadd.f32 %v636, %v40
    %v645 = vsel %vm135, %v637, -inf
    %646 = vmax.xlane.f32.xlu0 %v645
    %v647 = vpop.xlane.xlu0 %646
    %v648 = vsel %vm135, %v638, -inf
    %649 = vmax.xlane.f32.xlu0 %v648
    %v650 = vpop.xlane.xlu0 %649
    %v651 = vsel %vm135, %v639, -inf
    %652 = vmax.xlane.f32.xlu0 %v651
    %v653 = vpop.xlane.xlu0 %652
    %v654 = vsel %vm135, %v640, -inf
    %655 = vmax.xlane.f32.xlu0 %v654
    %v656 = vpop.xlane.xlu0 %655
    %v657 = vsel %vm135, %v641, -inf
    %658 = vmax.xlane.f32.xlu0 %v657
    %v659 = vpop.xlane.xlu0 %658
    %v660 = vsel %vm135, %v642, -inf
    %661 = vmax.xlane.f32.xlu0 %v660
    %v662 = vpop.xlane.xlu0 %661
    %v663 = vsel %vm135, %v643, -inf
    %664 = vmax.xlane.f32.xlu0 %v663
    %v665 = vpop.xlane.xlu0 %664
    %v666 = vsel %vm135, %v644, -inf
    %667 = vmax.xlane.f32.xlu0 %v666
    %v668 = vpop.xlane.xlu0 %667
    %v669 = vsub.f32 %v637, %v647
    %v670 = vsub.f32 %v638, %v650
    %v671 = vsub.f32 %v639, %v653
    %v672 = vsub.f32 %v640, %v656
    %v673 = vsub.f32 %v641, %v659
    %v674 = vsub.f32 %v642, %v662
    %v675 = vsub.f32 %v643, %v665
    %v676 = vsub.f32 %v644, %v668
    %v677 = vmul.f32 %v669, 1.442695
    %v678 = vpow.pop %v677
    %v679 = vmul.f32 %v670, 1.442695
    %v680 = vpow.pop %v679
    %v681 = vmul.f32 %v671, 1.442695
    %v682 = vpow.pop %v681
    %v683 = vmul.f32 %v672, 1.442695
    %v684 = vpow.pop %v683
    %v685 = vmul.f32 %v673, 1.442695
    %v686 = vpow.pop %v685
    %v687 = vmul.f32 %v674, 1.442695
    %v688 = vpow.pop %v687
    %v689 = vmul.f32 %v675, 1.442695
    %v690 = vpow.pop %v689
    %v691 = vmul.f32 %v676, 1.442695
    %v692 = vpow.pop %v691
    %v693 = vsel %vm135, %v678, 0.0
    %694 = vadd.xlane.f32.xlu0 %v693
    %v695 = vpop.xlane.xlu0 %694
    %v696 = vsel %vm135, %v680, 0.0
    %697 = vadd.xlane.f32.xlu0 %v696
    %v698 = vpop.xlane.xlu0 %697
    %v699 = vsel %vm135, %v682, 0.0
    %700 = vadd.xlane.f32.xlu0 %v699
    %v701 = vpop.xlane.xlu0 %700
    %v702 = vsel %vm135, %v684, 0.0
    %703 = vadd.xlane.f32.xlu0 %v702
    %v704 = vpop.xlane.xlu0 %703
    %v705 = vsel %vm135, %v686, 0.0
    %706 = vadd.xlane.f32.xlu0 %v705
    %v707 = vpop.xlane.xlu0 %706
    %v708 = vsel %vm135, %v688, 0.0
    %709 = vadd.xlane.f32.xlu0 %v708
    %v710 = vpop.xlane.xlu0 %709
    %v711 = vsel %vm135, %v690, 0.0
    %712 = vadd.xlane.f32.xlu0 %v711
    %v713 = vpop.xlane.xlu0 %712
    %v714 = vsel %vm135, %v692, 0.0
    %715 = vadd.xlane.f32.xlu0 %v714
    %v716 = vpop.xlane.xlu0 %715
    %v717 = vrcp.pop %v695
    %v718 = vrcp.pop %v698
    %v719 = vrcp.pop %v701
    %v720 = vrcp.pop %v704
    %v721 = vrcp.pop %v707
    %v722 = vrcp.pop %v710
    %v723 = vrcp.pop %v713
    %v724 = vrcp.pop %v716
    %v725 = vmul.f32 %v695, %v717
    %v726 = vmul.f32 %v698, %v718
    %v727 = vmul.f32 %v701, %v719
    %v728 = vmul.f32 %v704, %v720
    %v729 = vmul.f32 %v707, %v721
    %v730 = vmul.f32 %v710, %v722
    %v731 = vmul.f32 %v713, %v723
    %v732 = vmul.f32 %v716, %v724
    %v733 = vsub.f32 2.0, %v725
    %v734 = vsub.f32 2.0, %v726
    %v735 = vsub.f32 2.0, %v727
    %v736 = vsub.f32 2.0, %v728
    %v737 = vsub.f32 2.0, %v729
    %v738 = vsub.f32 2.0, %v730
    %v739 = vsub.f32 2.0, %v731
    %v740 = vsub.f32 2.0, %v732
    %v741 = vmul.f32 %v717, %v733
    %v742 = vmul.f32 %v718, %v734
    %v743 = vmul.f32 %v719, %v735
    %v744 = vmul.f32 %v720, %v736
    %v745 = vmul.f32 %v721, %v737
    %v746 = vmul.f32 %v722, %v738
    %v747 = vmul.f32 %v723, %v739
    %v748 = vmul.f32 %v724, %v740
    %v749 = vmul.f32 %v678, %v741
    %v750 = vmul.f32 %v680, %v742
    %v751 = vmul.f32 %v682, %v743
    %v752 = vmul.f32 %v684, %v744
    %v753 = vmul.f32 %v686, %v745
    %v754 = vmul.f32 %v688, %v746
    %v755 = vmul.f32 %v690, %v747
    %v756 = vmul.f32 %v692, %v748
    %v758 = vsel %vm135, %v749, 0
    %v761 = vsel %vm135, %v750, 0
    %763 = vmatpush.msra.mxu0 0.0
    %764 = vmatpush.msra.mxu0 0.0
    %765 = vmatpush.msra.mxu0 0.0
    %766 = vmatpush.msra.mxu0 0.0
    %767 = vmatpush.msra.mxu0 0.0
    %768 = vmatpush.msra.mxu0 0.0
    %769 = vmatpush.msra.mxu0 0.0
    %770 = vmatpush.msra.mxu0 0.0
    %771 = vmatpush.msra.mxu0 0.0
    %772 = vmatpush.msra.mxu0 0.0
    %773 = vmatpush.msra.mxu0 0.0
    %774 = vmatpush.msra.mxu0 0.0
    %775 = vmatpush.msra.mxu0 0.0
    %776 = vmatpush.msra.mxu0 0.0
    %777 = vmatpush.msra.mxu0 %v252
    %778 = vmatpush.msra.mxu0 %v249
    %779 = vmatmul.f32.gmra.mxu0 %v758
    %v780 = vpop.f32.mrf.mxu0
    %v781 = vadd.f32 0.0, %v780
    %782 = vmatmul.f32.gmra.mxu0 %v761
    %v783 = vpop.f32.mrf.mxu0
    %v784 = vadd.f32 0.0, %v783
    %785 = vdwg.mxu0
    %v787 = vsel %vm254, %v781, 0
    %v790 = vsel %vm254, %v784, 0
    %792 = vmatpush.msra.mxu0 0.0
    %793 = vmatpush.msra.mxu0 0.0
    %794 = vmatpush.msra.mxu0 0.0
    %795 = vmatpush.msra.mxu0 0.0
    %796 = vmatpush.msra.mxu0 0.0
    %797 = vmatpush.msra.mxu0 0.0
    %798 = vmatpush.msra.mxu0 0.0
    %799 = vmatpush.msra.mxu0 0.0
    %800 = vmatpush.msra.mxu0 0.0
    %801 = vmatpush.msra.mxu0 0.0
    %802 = vmatpush.msra.mxu0 0.0
    %803 = vmatpush.msra.mxu0 0.0
    %804 = vmatpush.msra.mxu0 0.0
    %805 = vmatpush.msra.mxu0 0.0
    %806 = vmatpush.msra.mxu0 0.0
    %807 = vmatpush.msra.mxu0 %v130
    %808 = vmatmul.f32.gmra.mxu0 %v787
    %v809 = vpop.f32.mrf.mxu0
    %v810 = vadd.f32 0.0, %v809
    %811 = vmatmul.f32.gmra.mxu0 %v790
    %v812 = vpop.f32.mrf.mxu0
    %v813 = vadd.f32 0.0, %v812
    %814 = vdwg.mxu0
    %v815 = vperm.slane %v62, 0
    %v816 = vadd.f32 %v815, %v810
    %v817 = vadd.f32 %v815, %v813
    %v819 = vsel %vm135, %v751, 0
    %v822 = vsel %vm135, %v752, 0
    %824 = vmatpush.msra.mxu0 0.0
    %825 = vmatpush.msra.mxu0 0.0
    %826 = vmatpush.msra.mxu0 0.0
    %827 = vmatpush.msra.mxu0 0.0
    %828 = vmatpush.msra.mxu0 0.0
    %829 = vmatpush.msra.mxu0 0.0
    %830 = vmatpush.msra.mxu0 0.0
    %831 = vmatpush.msra.mxu0 0.0
    %832 = vmatpush.msra.mxu0 0.0
    %833 = vmatpush.msra.mxu0 0.0
    %834 = vmatpush.msra.mxu0 0.0
    %835 = vmatpush.msra.mxu0 0.0
    %836 = vmatpush.msra.mxu0 0.0
    %837 = vmatpush.msra.mxu0 0.0
    %838 = vmatpush.msra.mxu0 %v368
    %839 = vmatpush.msra.mxu0 %v365
    %840 = vmatmul.f32.gmra.mxu0 %v819
    %v841 = vpop.f32.mrf.mxu0
    %v842 = vadd.f32 0.0, %v841
    %843 = vmatmul.f32.gmra.mxu0 %v822
    %v844 = vpop.f32.mrf.mxu0
    %v845 = vadd.f32 0.0, %v844
    %846 = vdwg.mxu0
    %v848 = vsel %vm254, %v842, 0
    %v851 = vsel %vm254, %v845, 0
    %853 = vmatpush.msra.mxu0 0.0
    %854 = vmatpush.msra.mxu0 0.0
    %855 = vmatpush.msra.mxu0 0.0
    %856 = vmatpush.msra.mxu0 0.0
    %857 = vmatpush.msra.mxu0 0.0
    %858 = vmatpush.msra.mxu0 0.0
    %859 = vmatpush.msra.mxu0 0.0
    %860 = vmatpush.msra.mxu0 0.0
    %861 = vmatpush.msra.mxu0 0.0
    %862 = vmatpush.msra.mxu0 0.0
    %863 = vmatpush.msra.mxu0 0.0
    %864 = vmatpush.msra.mxu0 0.0
    %865 = vmatpush.msra.mxu0 0.0
    %866 = vmatpush.msra.mxu0 0.0
    %867 = vmatpush.msra.mxu0 0.0
    %868 = vmatpush.msra.mxu0 %v131
    %869 = vmatmul.f32.gmra.mxu0 %v848
    %v870 = vpop.f32.mrf.mxu0
    %v871 = vadd.f32 0.0, %v870
    %872 = vmatmul.f32.gmra.mxu0 %v851
    %v873 = vpop.f32.mrf.mxu0
    %v874 = vadd.f32 0.0, %v873
    %875 = vdwg.mxu0
    %v876 = vadd.f32 %v816, %v871
    %v877 = vadd.f32 %v817, %v874
    %v879 = vsel %vm135, %v753, 0
    %v882 = vsel %vm135, %v754, 0
    %884 = vmatpush.msra.mxu0 0.0
    %885 = vmatpush.msra.mxu0 0.0
    %886 = vmatpush.msra.mxu0 0.0
    %887 = vmatpush.msra.mxu0 0.0
    %888 = vmatpush.msra.mxu0 0.0
    %889 = vmatpush.msra.mxu0 0.0
    %890 = vmatpush.msra.mxu0 0.0
    %891 = vmatpush.msra.mxu0 0.0
    %892 = vmatpush.msra.mxu0 0.0
    %893 = vmatpush.msra.mxu0 0.0
    %894 = vmatpush.msra.mxu0 0.0
    %895 = vmatpush.msra.mxu0 0.0
    %896 = vmatpush.msra.mxu0 0.0
    %897 = vmatpush.msra.mxu0 0.0
    %898 = vmatpush.msra.mxu0 %v483
    %899 = vmatpush.msra.mxu0 %v480
    %900 = vmatmul.f32.gmra.mxu0 %v879
    %v901 = vpop.f32.mrf.mxu0
    %v902 = vadd.f32 0.0, %v901
    %903 = vmatmul.f32.gmra.mxu0 %v882
    %v904 = vpop.f32.mrf.mxu0
    %v905 = vadd.f32 0.0, %v904
    %906 = vdwg.mxu0
    %v908 = vsel %vm254, %v902, 0
    %v911 = vsel %vm254, %v905, 0
    %913 = vmatpush.msra.mxu0 0.0
    %914 = vmatpush.msra.mxu0 0.0
    %915 = vmatpush.msra.mxu0 0.0
    %916 = vmatpush.msra.mxu0 0.0
    %917 = vmatpush.msra.mxu0 0.0
    %918 = vmatpush.msra.mxu0 0.0
    %919 = vmatpush.msra.mxu0 0.0
    %920 = vmatpush.msra.mxu0 0.0
    %921 = vmatpush.msra.mxu0 0.0
    %922 = vmatpush.msra.mxu0 0.0
    %923 = vmatpush.msra.mxu0 0.0
    %924 = vmatpush.msra.mxu0 0.0
    %925 = vmatpush.msra.mxu0 0.0
    %926 = vmatpush.msra.mxu0 0.0
    %927 = vmatpush.msra.mxu0 0.0
    %928 = vmatpush.msra.mxu0 %v132
    %929 = vmatmul.f32.gmra.mxu0 %v908
    %v930 = vpop.f32.mrf.mxu0
    %v931 = vadd.f32 0.0, %v930
    %932 = vmatmul.f32.gmra.mxu0 %v911
    %v933 = vpop.f32.mrf.mxu0
    %v934 = vadd.f32 0.0, %v933
    %935 = vdwg.mxu0
    %v936 = vadd.f32 %v876, %v931
    %v937 = vadd.f32 %v877, %v934
    %v939 = vsel %vm135, %v755, 0
    %v942 = vsel %vm135, %v756, 0
    %944 = vmatpush.msra.mxu0 0.0
    %945 = vmatpush.msra.mxu0 0.0
    %946 = vmatpush.msra.mxu0 0.0
    %947 = vmatpush.msra.mxu0 0.0
    %948 = vmatpush.msra.mxu0 0.0
    %949 = vmatpush.msra.mxu0 0.0
    %950 = vmatpush.msra.mxu0 0.0
    %951 = vmatpush.msra.mxu0 0.0
    %952 = vmatpush.msra.mxu0 0.0
    %953 = vmatpush.msra.mxu0 0.0
    %954 = vmatpush.msra.mxu0 0.0
    %955 = vmatpush.msra.mxu0 0.0
    %956 = vmatpush.msra.mxu0 0.0
    %957 = vmatpush.msra.mxu0 0.0
    %958 = vmatpush.msra.mxu0 %v598
    %959 = vmatpush.msra.mxu0 %v595
    %960 = vmatmul.f32.gmra.mxu0 %v939
    %v961 = vpop.f32.mrf.mxu0
    %v962 = vadd.f32 0.0, %v961
    %963 = vmatmul.f32.gmra.mxu0 %v942
    %v964 = vpop.f32.mrf.mxu0
    %v965 = vadd.f32 0.0, %v964
    %966 = vdwg.mxu0
    %v968 = vsel %vm254, %v962, 0
    %v971 = vsel %vm254, %v965, 0
    %973 = vmatpush.msra.mxu0 0.0
    %974 = vmatpush.msra.mxu0 0.0
    %975 = vmatpush.msra.mxu0 0.0
    %976 = vmatpush.msra.mxu0 0.0
    %977 = vmatpush.msra.mxu0 0.0
    %978 = vmatpush.msra.mxu0 0.0
    %979 = vmatpush.msra.mxu0 0.0
    %980 = vmatpush.msra.mxu0 0.0
    %981 = vmatpush.msra.mxu0 0.0
    %982 = vmatpush.msra.mxu0 0.0
    %983 = vmatpush.msra.mxu0 0.0
    %984 = vmatpush.msra.mxu0 0.0
    %985 = vmatpush.msra.mxu0 0.0
    %986 = vmatpush.msra.mxu0 0.0
    %987 = vmatpush.msra.mxu0 0.0
    %988 = vmatpush.msra.mxu0 %v133
    %989 = vmatmul.f32.gmra.mxu0 %v968
    %v990 = vpop.f32.mrf.mxu0
    %v991 = vadd.f32 0.0, %v990
    %992 = vmatmul.f32.gmra.mxu0 %v971
    %v993 = vpop.f32.mrf.mxu0
    %v994 = vadd.f32 0.0, %v993
    %995 = vdwg.mxu0
    %v996 = vadd.f32 %v936, %v991
    %v997 = vadd.f32 %v937, %v994
    %v998 = vadd.f32 %v167, %v996
    %v999 = vadd.f32 %v168, %v997
    %v1000 = vsel %vm172, %v998, 0.0
    %1001 = vadd.xlane.f32.xlu0 %v1000
    %v1002 = vpop.xlane.xlu0 %1001
    %v1003 = vsel %vm172, %v999, 0.0
    %1004 = vadd.xlane.f32.xlu0 %v1003
    %v1005 = vpop.xlane.xlu0 %1004
    %v1006 = vrcp.pop 32.0
    %v1007 = vmul.f32 32.0, %v1006
    %v1008 = vsub.f32 1.0, %v1007
    %v1009 = vmul.f32 %v1006, %v1008
    %v1010 = vadd.f32 %v1006, %v1009
    %vm1011 = vweird.f32 %v1006
    %v1012 = vsel %vm1011, %v1006, %v1010
    %v1013 = vmul.f32 %v1002, %v1012
    %v1014 = vmul.f32 %v1005, %v1012
    %v1015 = vsub.f32 %v998, %v1013
    %v1016 = vsub.f32 %v999, %v1014
    %v1017 = vmul.f32 %v1015, %v1015
    %v1018 = vmul.f32 %v1016, %v1016
    %v1019 = vsel %vm172, %v1017, 0.0
    %1020 = vadd.xlane.f32.xlu0 %v1019
    %v1021 = vpop.xlane.xlu0 %1020
    %v1022 = vsel %vm172, %v1018, 0.0
    %1023 = vadd.xlane.f32.xlu0 %v1022
    %v1024 = vpop.xlane.xlu0 %1023
    %v1025 = vmul.f32 %v1021, %v1012
    %v1026 = vmul.f32 %v1024, %v1012
    %v1027 = vadd.f32 %v1025, 1e-05
    %v1028 = vadd.f32 %v1026, 1e-05
    %v1029 = vrsqrt.pop %v1027
    %v1030 = vmul.f32 %v1029, %v1027
    %v1031 = vmul.f32 %v1030, %v1029
    %v1032 = vmul.f32 0.5, %v1031
    %v1033 = vsub.f32 1.5, %v1032
    %v1034 = vmul.f32 %v1029, %v1033
    %vm1035 = vweird.f32 %v1027
    %vm1036 = vweird.f32 %v1029
    %vm1037 = vmor %vm1035, %vm1036
    %v1038 = vsel %vm1037, %v1029, %v1034
    %v1039 = vrsqrt.pop %v1028
    %v1040 = vmul.f32 %v1039, %v1028
    %v1041 = vmul.f32 %v1040, %v1039
    %v1042 = vmul.f32 0.5, %v1041
    %v1043 = vsub.f32 1.5, %v1042
    %v1044 = vmul.f32 %v1039, %v1043
    %vm1045 = vweird.f32 %v1028
    %vm1046 = vweird.f32 %v1039
    %vm1047 = vmor %vm1045, %vm1046
    %v1048 = vsel %vm1047, %v1039, %v1044
    %v1049 = vmul.f32 %v1015, %v1038
    %v1050 = vmul.f32 %v1016, %v1048
    %v1051 = vperm.slane %v63, 0
    %v1052 = vmul.f32 %v1049, %v1051
    %v1053 = vmul.f32 %v1050, %v1051
    %v1054 = vperm.slane %v64, 0
    %v1055 = vadd.f32 %v1052, %v1054
    %v1056 = vadd.f32 %v1053, %v1054
    %v1057 = vperm.slane %v60, 0
    %v1059 = vsel %vm172, %v1055, 0
    %v1062 = vsel %vm172, %v1056, 0
    %1064 = vmatpush.msra.mxu0 0.0
    %1065 = vmatpush.msra.mxu0 0.0
    %1066 = vmatpush.msra.mxu0 0.0
    %1067 = vmatpush.msra.mxu0 0.0
    %1068 = vmatpush.msra.mxu0 0.0
    %1069 = vmatpush.msra.mxu0 0.0
    %1070 = vmatpush.msra.mxu0 0.0
    %1071 = vmatpush.msra.mxu0 0.0
    %1072 = vmatpush.msra.mxu0 0.0
    %1073 = vmatpush.msra.mxu0 0.0
    %1074 = vmatpush.msra.mxu0 0.0
    %1075 = vmatpush.msra.mxu0 0.0
    %1076 = vmatpush.msra.mxu0 %v59
    %1077 = vmatpush.msra.mxu0 %v58
    %1078 = vmatpush.msra.mxu0 %v57
    %1079 = vmatpush.msra.mxu0 %v56
    %1080 = vmatmul.f32.gmra.mxu0 %v1059
    %v1081 = vpop.f32.mrf.mxu0
    %v1082 = vadd.f32 %v1057, %v1081
    %1083 = vmatmul.f32.gmra.mxu0 %v1062
    %v1084 = vpop.f32.mrf.mxu0
    %v1085 = vadd.f32 %v1057, %v1084
    %1086 = vdwg.mxu0
    %v1087 = vmax.f32 %v1082, 0.0
    %v1088 = vmax.f32 %v1085, 0.0
    %v1089 = vperm.slane %v65, 0
    %vm1090 = vcmask 523264
    %v1092 = vsel %vm1090, %v1087, 0
    %v1095 = vsel %vm1090, %v1088, 0
    %1097 = vmatpush.msra.mxu0 0.0
    %1098 = vmatpush.msra.mxu0 0.0
    %1099 = vmatpush.msra.mxu0 0.0
    %1100 = vmatpush.msra.mxu0 0.0
    %1101 = vmatpush.msra.mxu0 0.0
    %1102 = vmatpush.msra.mxu0 0.0
    %1103 = vmatpush.msra.mxu0 0.0
    %1104 = vmatpush.msra.mxu0 0.0
    %1105 = vmatpush.msra.mxu0 %v50
    %1106 = vmatpush.msra.mxu0 %v49
    %1107 = vmatpush.msra.mxu0 %v48
    %1108 = vmatpush.msra.mxu0 %v47
    %1109 = vmatpush.msra.mxu0 %v46
    %1110 = vmatpush.msra.mxu0 %v45
    %1111 = vmatpush.msra.mxu0 %v44
    %1112 = vmatpush.msra.mxu0 %v43
    %1113 = vmatmul.f32.gmra.mxu0 %v1092
    %v1114 = vpop.f32.mrf.mxu0
    %v1115 = vadd.f32 %v1089, %v1114
    %1116 = vmatmul.f32.gmra.mxu0 %v1095
    %v1117 = vpop.f32.mrf.mxu0
    %v1118 = vadd.f32 %v1089, %v1117
    %1119 = vdwg.mxu0
    %v1120 = vadd.f32 %v1055, %v1115
    %v1121 = vadd.f32 %v1056, %v1118
    %v1122 = vsel %vm172, %v1120, 0.0
    %1123 = vadd.xlane.f32.xlu0 %v1122
    %v1124 = vpop.xlane.xlu0 %1123
    %v1125 = vsel %vm172, %v1121, 0.0
    %1126 = vadd.xlane.f32.xlu0 %v1125
    %v1127 = vpop.xlane.xlu0 %1126
    %v1128 = vmul.f32 %v1124, %v1012
    %v1129 = vmul.f32 %v1127, %v1012
    %v1130 = vsub.f32 %v1120, %v1128
    %v1131 = vsub.f32 %v1121, %v1129
    %v1132 = vmul.f32 %v1130, %v1130
    %v1133 = vmul.f32 %v1131, %v1131
    %v1134 = vsel %vm172, %v1132, 0.0
    %1135 = vadd.xlane.f32.xlu0 %v1134
    %v1136 = vpop.xlane.xlu0 %1135
    %v1137 = vsel %vm172, %v1133, 0.0
    %1138 = vadd.xlane.f32.xlu0 %v1137
    %v1139 = vpop.xlane.xlu0 %1138
    %v1140 = vmul.f32 %v1136, %v1012
    %v1141 = vmul.f32 %v1139, %v1012
    %v1142 = vadd.f32 %v1140, 1e-05
    %v1143 = vadd.f32 %v1141, 1e-05
    %v1144 = vrsqrt.pop %v1142
    %v1145 = vmul.f32 %v1144, %v1142
    %v1146 = vmul.f32 %v1145, %v1144
    %v1147 = vmul.f32 0.5, %v1146
    %v1148 = vsub.f32 1.5, %v1147
    %v1149 = vmul.f32 %v1144, %v1148
    %vm1150 = vweird.f32 %v1142
    %vm1151 = vweird.f32 %v1144
    %vm1152 = vmor %vm1150, %vm1151
    %v1153 = vsel %vm1152, %v1144, %v1149
    %v1154 = vrsqrt.pop %v1143
    %v1155 = vmul.f32 %v1154, %v1143
    %v1156 = vmul.f32 %v1155, %v1154
    %v1157 = vmul.f32 0.5, %v1156
    %v1158 = vsub.f32 1.5, %v1157
    %v1159 = vmul.f32 %v1154, %v1158
    %vm1160 = vweird.f32 %v1143
    %vm1161 = vweird.f32 %v1154
    %vm1162 = vmor %vm1160, %vm1161
    %v1163 = vsel %vm1162, %v1154, %v1159
    %v1164 = vmul.f32 %v1130, %v1153
    %v1165 = vmul.f32 %v1131, %v1163
    %v1166 = vperm.slane %v66, 0
    %v1167 = vmul.f32 %v1164, %v1166
    %v1168 = vmul.f32 %v1165, %v1166
    %v1169 = vperm.slane %v67, 0
    %v1170 = vadd.f32 %v1167, %v1169
    %v1171 = vadd.f32 %v1168, %v1169
    %1172 = vst.msk [vmem:[#allocation2] sm:$0xff] %vm172, %v1170
    %1173 = vst.msk [vmem:[#allocation2 + $0x8] sm:$0xff] %vm172, %v1171
    %v1174 = vperm.slane %v68, 0
    %v1176 = vsel %vm172, %v1170, 0
    %v1179 = vsel %vm172, %v1171, 0
    %1181 = vmatpush.msra.mxu0 0.0
    %1182 = vmatpush.msra.mxu0 0.0
    %1183 = vmatpush.msra.mxu0 0.0
    %1184 = vmatpush.msra.mxu0 0.0
    %1185 = vmatpush.msra.mxu0 0.0
    %1186 = vmatpush.msra.mxu0 0.0
    %1187 = vmatpush.msra.mxu0 0.0
    %1188 = vmatpush.msra.mxu0 0.0
    %1189 = vmatpush.msra.mxu0 0.0
    %1190 = vmatpush.msra.mxu0 0.0
    %1191 = vmatpush.msra.mxu0 0.0
    %1192 = vmatpush.msra.mxu0 0.0
    %1193 = vmatpush.msra.mxu0 %v54
    %1194 = vmatpush.msra.mxu0 %v53
    %1195 = vmatpush.msra.mxu0 %v52
    %1196 = vmatpush.msra.mxu0 %v51
    %1197 = vmatmul.f32.gmra.mxu0 %v1176
    %v1198 = vpop.f32.mrf.mxu0
    %v1199 = vadd.f32 %v1174, %v1198
    %1200 = vmatmul.f32.gmra.mxu0 %v1179
    %v1201 = vpop.f32.mrf.mxu0
    %v1202 = vadd.f32 %v1174, %v1201
    %1203 = vdwg.mxu0
    %v1205 = vsel %vm172, %v55, 0
    %v1208 = vsel %vm172, %v1199, 0
    %v1211 = vsel %vm172, %v1202, 0
    %1213 = vmatpush.xpose.msra.mxu0 0.0
    %1214 = vmatpush.xpose.msra.mxu0 0.0
    %1215 = vmatpush.xpose.msra.mxu0 0.0
    %1216 = vmatpush.xpose.msra.mxu0 0.0
    %1217 = vmatpush.xpose.msra.mxu0 0.0
    %1218 = vmatpush.xpose.msra.mxu0 0.0
    %1219 = vmatpush.xpose.msra.mxu0 0.0
    %1220 = vmatpush.xpose.msra.mxu0 0.0
    %1221 = vmatpush.xpose.msra.mxu0 0.0
    %1222 = vmatpush.xpose.msra.mxu0 0.0
    %1223 = vmatpush.xpose.msra.mxu0 0.0
    %1224 = vmatpush.xpose.msra.mxu0 0.0
    %1225 = vmatpush.xpose.msra.mxu0 0.0
    %1226 = vmatpush.xpose.msra.mxu0 0.0
    %1227 = vmatpush.xpose.msra.mxu0 %v1211
    %1228 = vmatpush.xpose.msra.mxu0 %v1208
    %1229 = vmatmul.f32.gmra.mxu0 %v1205
    %v1230 = vpop.f32.mrf.mxu0
    %v1231 = vadd.f32 %v69, %v1230
    %1232 = vdwg.mxu0
    %vm1233 = vcmask 122880
    %1234 = vst.msk [vmem:[%s10] sm:$0x1] %vm1233, %v1231
    // Predicated region
    $region38: #{ltr_forward.1} parent=1 // pred_check
      _
    $region39: #{ltr_forward.1} parent=1 // pred_check_branch
      %1236 = sbr.rel (0) target = $region41
    $region40: #{ltr_forward.1} parent=1 // pred_region
      %1238 = vsyncadd [#allocation3], 0
      %s1239 = sshll.u32 [#allocation2], 4
      %s1240 = int_to_ptr.vmem [resolvable:$true] %s1239
      %s1241 = sshll.u32 %s9, 4
      %s1242 = int_to_ptr.hbm [resolvable:$true] %s1241
      %1247 = dma.vmem_to_hbm [thread:$0]  %s1240, 256, %s1242, [#allocation3], 128, 128, 8
    $region41: #{ltr_forward.1} parent=1 // pred_fallthru
      _
    // Predicated region
    $region42: #{ltr_forward.1} parent=1 // pred_check
      _
    $region43: #{ltr_forward.1} parent=1 // pred_check_branch
      %1249 = sbr.rel (0) target = $region45
    $region44: #{ltr_forward.1} parent=1 // pred_region
      _
    $region45: #{ltr_forward.1} parent=1 // pred_fallthru
      _
    // Predicated region
    $region46: #{ltr_forward.1} parent=1 // pred_check
      _
    $region47: #{ltr_forward.1} parent=1 // pred_check_branch
      %1251 = sbr.rel (0) target = $region49
    $region48: #{ltr_forward.1} parent=1 // pred_region
      %1253 = dma.done [#allocation3], 256
    $region49: #{ltr_forward.1} parent=1 // pred_fallthru
      _
    // Predicated region
    $region50: #{ltr_forward.1} parent=1 // pred_check
      _
    $region51: #{ltr_forward.1} parent=1 // pred_check_branch
      %1255 = sbr.rel (0) target = $region53
    $region52: #{ltr_forward.1} parent=1 // pred_region
      _
    $region53: #{ltr_forward.1} parent=1 // pred_fallthru
      _
    %1256 = vsyncpa [#allocation3], 1

</llo_original>
